<compile_context>
chip_gen: v7x
topology: tpu7x:2x2x1
jax: 0.10.0
libtpu: 0.0.40
codegen_flags: <defaults>
</compile_context>

<pallas_src>
import functools
import math

import jax
import jax.numpy as jnp
from jax import lax
from jax.experimental import pallas as pl
from jax.experimental.pallas import tpu as pltpu

EPS = 1e-5  # LayerNorm eps (matches the reference LayerNorm)


# ----------------------------- in-kernel helpers -----------------------------

def _layernorm(x, scale, shift):
    # mean / biased variance over the last (embedding) axis, like the torch module
    mean = jnp.mean(x, axis=-1, keepdims=True)
    var = jnp.mean((x - mean) ** 2, axis=-1, keepdims=True)   # unbiased=False
    return scale * ((x - mean) * lax.rsqrt(var + EPS)) + shift


def _gelu(x):
    # tanh-approximation GELU (matches the reference GELU module)
    c = math.sqrt(2.0 / math.pi)
    return 0.5 * x * (1.0 + jnp.tanh(c * (x + 0.044715 * x ** 3)))


# ------------------------------- Pallas kernels -------------------------------

def transformer_stack_kernel(x_ref, ln1s_ref, ln1b_ref, wq_ref, wk_ref, wv_ref,
                             wo_ref, bo_ref, ln2s_ref, ln2b_ref,
                             w1_ref, b1_ref, w2_ref, b2_ref, out_ref,
                             *, num_heads, head_dim):
    """One (batch, layer) grid step: LN -> causal MHA -> residual -> LN -> FF
    -> residual, reading/writing the VMEM-resident residual stream in out_ref.
    Weights are bf16, accumulation/statistics f32."""
    layer = pl.program_id(1)

    # First layer for this batch element: seed the resident accumulator.
    @pl.when(layer == 0)
    def _():
        out_ref[...] = x_ref[...]

    x = out_ref[...]                                 # (S, D) f32 residual stream
    S = x.shape[0]

    # ---- attention sub-layer ----
    xn = _layernorm(x, ln1s_ref[...], ln1b_ref[...])
    xnb = xn.astype(jnp.bfloat16)
    # Fused projections: (S, D) @ (D, D) with heads packed along the output lanes.
    # 1/sqrt(head_dim) is folded into wq at parameter-init time.
    q = jnp.dot(xnb, wq_ref[...], preferred_element_type=jnp.float32)
    k = jnp.dot(xnb, wk_ref[...], preferred_element_type=jnp.float32)
    v = jnp.dot(xnb, wv_ref[...], preferred_element_type=jnp.float32)
    qb = q.astype(jnp.bfloat16)
    kb = k.astype(jnp.bfloat16)
    vb = v.astype(jnp.bfloat16)

    # Additive causal mask (single VPU add instead of a per-head select; the
    # diagonal is never masked so -1e30 is NaN-safe).
    rows = lax.broadcasted_iota(jnp.int32, (S, S), 0)
    cols = lax.broadcasted_iota(jnp.int32, (S, S), 1)
    neg_mask = jnp.where(cols > rows, jnp.float32(-1e30), jnp.float32(0.0))

    ctx_parts = []
    for h in range(num_heads):                       # static loop; K=head_dim is intrinsic
        sl = slice(h * head_dim, (h + 1) * head_dim)
        qh, kh, vh = qb[:, sl], kb[:, sl], vb[:, sl]
        s = jnp.einsum('qe,ke->qk', qh, kh,
                       preferred_element_type=jnp.float32)         # (S, S) f32
        s = s + neg_mask
        m = jnp.max(s, axis=-1, keepdims=True)
        p = jnp.exp(s - m)
        denom = jnp.sum(p, axis=-1, keepdims=True)
        p = p * pl.reciprocal(denom, approx=True)                  # EUP, not VPU divide
        ctx_parts.append(jnp.dot(p.astype(jnp.bfloat16), vh,
                                 preferred_element_type=jnp.float32))
    ctx = jnp.concatenate(ctx_parts, axis=-1)        # (S, D)
    attn = jnp.dot(ctx.astype(jnp.bfloat16), wo_ref[...],
                   preferred_element_type=jnp.float32) + bo_ref[...]
    # TODO(synk): dropout (drop_rate) is identity here (rate 0.0 / eval mode).
    x = x + attn                                     # residual (f32)

    # ---- feed-forward sub-layer ----
    xn2 = _layernorm(x, ln2s_ref[...], ln2b_ref[...])
    h1 = jnp.dot(xn2.astype(jnp.bfloat16), w1_ref[...],
                 preferred_element_type=jnp.float32) + b1_ref[...]
    h1 = _gelu(h1)
    ff = jnp.dot(h1.astype(jnp.bfloat16), w2_ref[...],
                 preferred_element_type=jnp.float32) + b2_ref[...]
    out_ref[...] = x + ff                            # residual; stays in VMEM across layers


def final_head_kernel(x_ref, lns_ref, lnb_ref, w_ref, out_ref):
    """final_norm + out_head (no bias), one (token_tile, vocab_tile) block."""
    xn = _layernorm(x_ref[...], lns_ref[...], lnb_ref[...])
    out_ref[...] = jnp.dot(xn.astype(jnp.bfloat16), w_ref[...],
                           preferred_element_type=jnp.float32)


# ------------------------------- JAX wrappers ---------------------------------

def _pick_tile(n, target, quantum):
    """Largest tile <= target that divides n and is a multiple of `quantum`
    (falls back to the full dim, which is always a legal block size)."""
    if n <= target:
        return n
    start = target - (target % quantum)
    for t in range(start, 0, -quantum):
        if n % t == 0:
            return t
    return n


def run_transformer_stack(x, stack, cfg):
    """All transformer blocks in one pallas_call: grid = (batch, layer)."""
    B, S, D = x.shape
    H = cfg['n_heads']
    hd = D // H
    F = 4 * D
    L = cfg['n_layers']
    kernel = functools.partial(transformer_stack_kernel, num_heads=H, head_dim=hd)

    def per_layer(shape):
        # Layer-stacked parameter: a fresh block per layer step, so the BlockSpec
        # pipeline prefetches layer l+1's weights while layer l computes.
        return pl.BlockSpec((None,) + shape,
                            lambda b, l, _n=len(shape): (l,) + (0,) * _n)

    args = (x, stack['ln1_s'], stack['ln1_b'], stack['wq'], stack['wk'],
            stack['wv'], stack['wo'], stack['bo'], stack['ln2_s'],
            stack['ln2_b'], stack['w1'], stack['b1'], stack['w2'], stack['b2'])
    in_specs = [
        pl.BlockSpec((None, S, D), lambda b, l: (b, 0, 0)),  # x: fetched once per batch elem
        per_layer((1, D)), per_layer((1, D)),                # ln1 scale/shift
        per_layer((D, D)), per_layer((D, D)), per_layer((D, D)),  # wq, wk, wv (bf16)
        per_layer((D, D)), per_layer((1, D)),                # wo, bo
        per_layer((1, D)), per_layer((1, D)),                # ln2 scale/shift
        per_layer((D, F)), per_layer((1, F)),                # w1, b1
        per_layer((F, D)), per_layer((1, D)),                # w2, b2
    ]
    return pl.pallas_call(
        kernel,
        out_shape=jax.ShapeDtypeStruct((B, S, D), jnp.float32),
        grid=(B, L),
        in_specs=in_specs,
        # Same block across the layer axis -> residual stream is a VMEM-resident
        # accumulator; HBM writeback happens once per batch element.
        out_specs=pl.BlockSpec((None, S, D), lambda b, l: (b, 0, 0)),
        compiler_params=pltpu.CompilerParams(
            dimension_semantics=("parallel", "arbitrary")),
    )(*args)


def run_final_head(x, ln_s, ln_b, w_out, vocab_size):
    B, S, D = x.shape
    T, V = B * S, vocab_size
    x_flat = x.reshape(T, D)
    TT = _pick_tile(T, 512, 8)      # token tile (sublane-quantized)
    TV = _pick_tile(V, 1024, 128)   # vocab tile (lane-dense, multiple of 128)
    logits = pl.pallas_call(
        final_head_kernel,
        out_shape=jax.ShapeDtypeStruct((T, V), jnp.float32),
        grid=(T // TT, V // TV),    # vocab axis innermost -> token tile reused
        in_specs=[
            pl.BlockSpec((TT, D), lambda t, v: (t, 0)),
            pl.BlockSpec((1, D), lambda t, v: (0, 0)),
            pl.BlockSpec((1, D), lambda t, v: (0, 0)),
            pl.BlockSpec((D, TV), lambda t, v: (0, v)),
        ],
        out_specs=pl.BlockSpec((TT, TV), lambda t, v: (t, v)),
        compiler_params=pltpu.CompilerParams(
            dimension_semantics=("parallel", "parallel")),
    )(x_flat, ln_s, ln_b, w_out)
    return logits.reshape(B, S, V)


def init_params(key, cfg):
    D = cfg['emb_dim']; V = cfg['vocab_size']; C = cfg['context_length']
    H = cfg['n_heads']; hd = D // H; L = cfg['n_layers']; F = 4 * D

    def nrm(k, shape):
        return (0.02 * jax.random.normal(k, shape)).astype(jnp.float32)

    keys = jax.random.split(key, 3 + L)
    qk_scale = 1.0 / math.sqrt(hd)
    wq, wk, wv, wo, w1, w2 = [], [], [], [], [], []
    for l in range(L):
        bk = jax.random.split(keys[3 + l], 6)
        # Heads packed along the output lane dim; 1/sqrt(head_dim) folded into wq.
        wq.append((nrm(bk[0], (D, D)) * qk_scale).astype(jnp.bfloat16))
        wk.append(nrm(bk[1], (D, D)).astype(jnp.bfloat16))
        wv.append(nrm(bk[2], (D, D)).astype(jnp.bfloat16))
        wo.append(nrm(bk[3], (D, D)).astype(jnp.bfloat16))
        w1.append(nrm(bk[4], (D, F)).astype(jnp.bfloat16))
        w2.append(nrm(bk[5], (F, D)).astype(jnp.bfloat16))

    params = {
        'tok_emb': nrm(keys[0], (V, D)),                        # f32 (gather in glue)
        'pos_emb': nrm(keys[1], (C, D)),
        'out_w': nrm(keys[2], (D, V)).astype(jnp.bfloat16),     # out_head (no bias)
        'final_ln_s': jnp.ones((1, D), jnp.float32),
        'final_ln_b': jnp.zeros((1, D), jnp.float32),
        'stack': dict(                                          # layer-stacked block params
            ln1_s=jnp.ones((L, 1, D), jnp.float32),
            ln1_b=jnp.zeros((L, 1, D), jnp.float32),
            wq=jnp.stack(wq), wk=jnp.stack(wk), wv=jnp.stack(wv), wo=jnp.stack(wo),
            bo=jnp.zeros((L, 1, D), jnp.float32),
            ln2_s=jnp.ones((L, 1, D), jnp.float32),
            ln2_b=jnp.zeros((L, 1, D), jnp.float32),
            w1=jnp.stack(w1), b1=jnp.zeros((L, 1, F), jnp.float32),
            w2=jnp.stack(w2), b2=jnp.zeros((L, 1, D), jnp.float32),
        ),
    }
    return params


def gpt_forward(params, in_idx, cfg):
    _, S = in_idx.shape
    # Embedding lookups (gather) kept in plain JAX glue; residual stream is f32.
    tok = jnp.take(params['tok_emb'], in_idx, axis=0)           # (B, S, D)
    pos = params['pos_emb'][:S]                                 # (S, D)
    x = tok + pos
    # drop_emb: identity (drop_rate = 0.0 / eval mode)
    x = run_transformer_stack(x, params['stack'], cfg)          # all layers, one kernel
    return run_final_head(x, params['final_ln_s'], params['final_ln_b'],
                          params['out_w'], cfg['vocab_size'])


if __name__ == "__main__":
    cfg = dict(vocab_size=128, context_length=16, emb_dim=32,
               n_heads=4, n_layers=2, drop_rate=0.0, qkv_bias=False)
    key = jax.random.PRNGKey(0)
    pkey, dkey = jax.random.split(key)
    params = init_params(pkey, cfg)
    in_idx = jax.random.randint(dkey, (2, 8), 0, cfg['vocab_size'], dtype=jnp.int32)

    fwd = jax.jit(functools.partial(gpt_forward, cfg=cfg))
    logits = fwd(params, in_idx)
    logits = jax.block_until_ready(logits)

    assert logits.shape == (2, 8, cfg['vocab_size']), logits.shape
    assert bool(jnp.all(jnp.isfinite(logits)))
    print("KERNEL_OK")
</pallas_src>

<mosaic_0001>
module attributes {stable_mosaic.version = 11 : i64} {
  func.func @final_head_kernel(%arg0: i32, %arg1: i32, %arg2: memref<16x32xf32, #tpu.memory_space<vmem>>, %arg3: memref<1x32xf32, #tpu.memory_space<vmem>>, %arg4: memref<1x32xf32, #tpu.memory_space<vmem>>, %arg5: memref<32x128xbf16, #tpu.memory_space<vmem>>, %arg6: memref<16x128xf32, #tpu.memory_space<vmem>>) attributes {dimension_semantics = [#tpu.dimension_semantics<parallel>, #tpu.dimension_semantics<parallel>], iteration_bounds = array<i64: 1, 1>, scalar_prefetch = 0 : i64, scratch_operands = 0 : i64, tpu.core_type = #tpu.core_type<tc>, window_params = [{transform_indices = @transform_0, window_bounds = array<i64: 16, 32>}, {pipeline_mode = #tpu.pipeline_mode<synchronous>, transform_indices = @transform_1, window_bounds = array<i64: 1, 32>}, {pipeline_mode = #tpu.pipeline_mode<synchronous>, transform_indices = @transform_2, window_bounds = array<i64: 1, 32>}, {transform_indices = @transform_3, window_bounds = array<i64: 32, 128>}, {transform_indices = @transform_4, window_bounds = array<i64: 16, 128>}]} {
    %c0 = arith.constant 0 : index
    %c0_0 = arith.constant 0 : index
    %0 = vector.load %arg2[%c0, %c0_0] : memref<16x32xf32, #tpu.memory_space<vmem>>, vector<16x32xf32>
    %c0_1 = arith.constant 0 : index
    %c0_2 = arith.constant 0 : index
    %1 = vector.load %arg3[%c0_1, %c0_2] : memref<1x32xf32, #tpu.memory_space<vmem>>, vector<1x32xf32>
    %c0_3 = arith.constant 0 : index
    %c0_4 = arith.constant 0 : index
    %2 = vector.load %arg4[%c0_3, %c0_4] : memref<1x32xf32, #tpu.memory_space<vmem>>, vector<1x32xf32>
    %cst = arith.constant dense<0.000000e+00> : vector<16xf32>
    %3 = vector.multi_reduction <add>, %0, %cst [1] : vector<16x32xf32> to vector<16xf32>
    %4 = vector.shape_cast %3 : vector<16xf32> to vector<16x1xf32>
    %cst_5 = arith.constant 3.200000e+01 : f32
    %5 = vector.broadcast %cst_5 : f32 to vector<16x1xf32>
    %6 = arith.divf %4, %5 : vector<16x1xf32>
    %7 = vector.broadcast %6 : vector<16x1xf32> to vector<16x32xf32>
    %8 = arith.subf %0, %7 : vector<16x32xf32>
    %9 = arith.mulf %8, %8 : vector<16x32xf32>
    %cst_6 = arith.constant dense<0.000000e+00> : vector<16xf32>
    %10 = vector.multi_reduction <add>, %9, %cst_6 [1] : vector<16x32xf32> to vector<16xf32>
    %11 = vector.shape_cast %10 : vector<16xf32> to vector<16x1xf32>
    %cst_7 = arith.constant 3.200000e+01 : f32
    %12 = vector.broadcast %cst_7 : f32 to vector<16x1xf32>
    %13 = arith.divf %11, %12 : vector<16x1xf32>
    %14 = vector.broadcast %6 : vector<16x1xf32> to vector<16x32xf32>
    %15 = arith.subf %0, %14 : vector<16x32xf32>
    %cst_8 = arith.constant 9.99999974E-6 : f32
    %16 = vector.broadcast %cst_8 : f32 to vector<16x1xf32>
    %17 = arith.addf %13, %16 : vector<16x1xf32>
    %18 = math.rsqrt %17 : vector<16x1xf32>
    %19 = vector.broadcast %18 : vector<16x1xf32> to vector<16x32xf32>
    %20 = arith.mulf %15, %19 : vector<16x32xf32>
    %21 = vector.broadcast %1 : vector<1x32xf32> to vector<16x32xf32>
    %22 = arith.mulf %21, %20 : vector<16x32xf32>
    %23 = vector.broadcast %2 : vector<1x32xf32> to vector<16x32xf32>
    %24 = arith.addf %22, %23 : vector<16x32xf32>
    %25 = arith.truncf %24 : vector<16x32xf32> to vector<16x32xbf16>
    %c0_9 = arith.constant 0 : index
    %c0_10 = arith.constant 0 : index
    %26 = vector.load %arg5[%c0_9, %c0_10] : memref<32x128xbf16, #tpu.memory_space<vmem>>, vector<32x128xbf16>
    %cst_11 = arith.constant dense<0.000000e+00> : vector<16x128xf32>
    %27 = tpu.matmul %25, %26, %cst_11 {dimension_numbers = #tpu.dot_dimension_numbers<[1], [0], [0], [1], [0, 0, 1, 1], [], []>} : vector<16x32xbf16>, vector<32x128xbf16>, vector<16x128xf32> -> vector<16x128xf32>
    %c0_12 = arith.constant 0 : index
    %c0_13 = arith.constant 0 : index
    %28 = vector.load %arg6[%c0_12, %c0_13] : memref<16x128xf32, #tpu.memory_space<vmem>>, vector<16x128xf32>
    tpu.vector_store %arg6[%c0_12, %c0_13], %27 {strides = array<i32>} : memref<16x128xf32, #tpu.memory_space<vmem>>, vector<16x128xf32>,
    return
  }
  func.func @transform_0(%arg0: i32, %arg1: i32) -> (i32, i32) {
    %c0_i32 = arith.constant 0 : i32
    %c0_i32_0 = arith.constant 0 : i32
    return %arg0, %c0_i32 : i32, i32
  }
  func.func @transform_1(%arg0: i32, %arg1: i32) -> (i32, i32) {
    %c0_i32 = arith.constant 0 : i32
    %c0_i32_0 = arith.constant 0 : i32
    %c0_i32_1 = arith.constant 0 : i32
    return %c0_i32, %c0_i32_0 : i32, i32
  }
  func.func @transform_2(%arg0: i32, %arg1: i32) -> (i32, i32) {
    %c0_i32 = arith.constant 0 : i32
    %c0_i32_0 = arith.constant 0 : i32
    %c0_i32_1 = arith.constant 0 : i32
    return %c0_i32, %c0_i32_0 : i32, i32
  }
  func.func @transform_3(%arg0: i32, %arg1: i32) -> (i32, i32) {
    %c0_i32 = arith.constant 0 : i32
    %c0_i32_0 = arith.constant 0 : i32
    return %c0_i32, %arg1 : i32, i32
  }
  func.func @transform_4(%arg0: i32, %arg1: i32) -> (i32, i32) {
    %c0_i32 = arith.constant 0 : i32
    return %arg0, %arg1 : i32, i32
  }
}

module attributes {stable_mosaic.version = 11 : i64} {
  func.func @transformer_stack_kernel(%arg0: i32, %arg1: i32, %arg2: memref<1x8x32xf32, #tpu.memory_space<vmem>>, %arg3: memref<1x1x32xf32, #tpu.memory_space<vmem>>, %arg4: memref<1x1x32xf32, #tpu.memory_space<vmem>>, %arg5: memref<1x32x32xbf16, #tpu.memory_space<vmem>>, %arg6: memref<1x32x32xbf16, #tpu.memory_space<vmem>>, %arg7: memref<1x32x32xbf16, #tpu.memory_space<vmem>>, %arg8: memref<1x32x32xbf16, #tpu.memory_space<vmem>>, %arg9: memref<1x1x32xf32, #tpu.memory_space<vmem>>, %arg10: memref<1x1x32xf32, #tpu.memory_space<vmem>>, %arg11: memref<1x1x32xf32, #tpu.memory_space<vmem>>, %arg12: memref<1x32x128xbf16, #tpu.memory_space<vmem>>, %arg13: memref<1x1x128xf32, #tpu.memory_space<vmem>>, %arg14: memref<1x128x32xbf16, #tpu.memory_space<vmem>>, %arg15: memref<1x1x32xf32, #tpu.memory_space<vmem>>, %arg16: memref<1x8x32xf32, #tpu.memory_space<vmem>>) attributes {dimension_semantics = [#tpu.dimension_semantics<parallel>, #tpu.dimension_semantics<arbitrary>], iteration_bounds = array<i64: 2, 2>, scalar_prefetch = 0 : i64, scratch_operands = 0 : i64, tpu.core_type = #tpu.core_type<tc>, window_params = [{transform_indices = @transform_0, window_bounds = array<i64: 1, 8, 32>}, {transform_indices = @transform_1, window_bounds = array<i64: 1, 1, 32>}, {transform_indices = @transform_2, window_bounds = array<i64: 1, 1, 32>}, {transform_indices = @transform_3, window_bounds = array<i64: 1, 32, 32>}, {transform_indices = @transform_4, window_bounds = array<i64: 1, 32, 32>}, {transform_indices = @transform_5, window_bounds = array<i64: 1, 32, 32>}, {transform_indices = @transform_6, window_bounds = array<i64: 1, 32, 32>}, {transform_indices = @transform_7, window_bounds = array<i64: 1, 1, 32>}, {transform_indices = @transform_8, window_bounds = array<i64: 1, 1, 32>}, {transform_indices = @transform_9, window_bounds = array<i64: 1, 1, 32>}, {transform_indices = @transform_10, window_bounds = array<i64: 1, 32, 128>}, {transform_indices = @transform_11, window_bounds = array<i64: 1, 1, 128>}, {transform_indices = @transform_12, window_bounds = array<i64: 1, 128, 32>}, {transform_indices = @transform_13, window_bounds = array<i64: 1, 1, 32>}, {transform_indices = @transform_14, window_bounds = array<i64: 1, 8, 32>}]} {
    %c0_i32 = arith.constant 0 : i32
    %0 = arith.cmpi eq, %arg1, %c0_i32 : i32
    %1 = arith.extui %0 : i1 to i32
    %c0_i32_0 = arith.constant 0 : i32
    %2 = arith.cmpi ne, %1, %c0_i32_0 : i32
    scf.if %2 {
      %c0_82 = arith.constant 0 : index
      %c0_83 = arith.constant 0 : index
      %c0_84 = arith.constant 0 : index
      %187 = vector.load %arg2[%c0_82, %c0_83, %c0_84] : memref<1x8x32xf32, #tpu.memory_space<vmem>>, vector<1x8x32xf32>
      %188 = vector.shape_cast %187 : vector<1x8x32xf32> to vector<8x32xf32>
      %c0_85 = arith.constant 0 : index
      %c0_86 = arith.constant 0 : index
      %c0_87 = arith.constant 0 : index
      %189 = vector.load %arg16[%c0_85, %c0_86, %c0_87] : memref<1x8x32xf32, #tpu.memory_space<vmem>>, vector<1x8x32xf32>
      %190 = vector.shape_cast %189 : vector<1x8x32xf32> to vector<8x32xf32>
      %191 = vector.shape_cast %188 : vector<8x32xf32> to vector<1x8x32xf32>
      tpu.vector_store %arg16[%c0_85, %c0_86, %c0_87], %191 {strides = array<i32>} : memref<1x8x32xf32, #tpu.memory_space<vmem>>, vector<1x8x32xf32>,
    } else {
    }
    %c0 = arith.constant 0 : index
    %c0_1 = arith.constant 0 : index
    %c0_2 = arith.constant 0 : index
    %3 = vector.load %arg16[%c0, %c0_1, %c0_2] : memref<1x8x32xf32, #tpu.memory_space<vmem>>, vector<1x8x32xf32>
    %4 = vector.shape_cast %3 : vector<1x8x32xf32> to vector<8x32xf32>
    %c0_3 = arith.constant 0 : index
    %c0_4 = arith.constant 0 : index
    %c0_5 = arith.constant 0 : index
    %5 = vector.load %arg3[%c0_3, %c0_4, %c0_5] : memref<1x1x32xf32, #tpu.memory_space<vmem>>, vector<1x1x32xf32>
    %6 = vector.shape_cast %5 : vector<1x1x32xf32> to vector<1x32xf32>
    %c0_6 = arith.constant 0 : index
    %c0_7 = arith.constant 0 : index
    %c0_8 = arith.constant 0 : index
    %7 = vector.load %arg4[%c0_6, %c0_7, %c0_8] : memref<1x1x32xf32, #tpu.memory_space<vmem>>, vector<1x1x32xf32>
    %8 = vector.shape_cast %7 : vector<1x1x32xf32> to vector<1x32xf32>
    %cst = arith.constant dense<0.000000e+00> : vector<8xf32>
    %9 = vector.multi_reduction <add>, %4, %cst [1] : vector<8x32xf32> to vector<8xf32>
    %10 = vector.shape_cast %9 : vector<8xf32> to vector<8x1xf32>
    %cst_9 = arith.constant 3.200000e+01 : f32
    %11 = vector.broadcast %cst_9 : f32 to vector<8x1xf32>
    %12 = arith.divf %10, %11 : vector<8x1xf32>
    %13 = vector.broadcast %12 : vector<8x1xf32> to vector<8x32xf32>
    %14 = arith.subf %4, %13 : vector<8x32xf32>
    %15 = arith.mulf %14, %14 : vector<8x32xf32>
    %cst_10 = arith.constant dense<0.000000e+00> : vector<8xf32>
    %16 = vector.multi_reduction <add>, %15, %cst_10 [1] : vector<8x32xf32> to vector<8xf32>
    %17 = vector.shape_cast %16 : vector<8xf32> to vector<8x1xf32>
    %cst_11 = arith.constant 3.200000e+01 : f32
    %18 = vector.broadcast %cst_11 : f32 to vector<8x1xf32>
    %19 = arith.divf %17, %18 : vector<8x1xf32>
    %20 = vector.broadcast %12 : vector<8x1xf32> to vector<8x32xf32>
    %21 = arith.subf %4, %20 : vector<8x32xf32>
    %cst_12 = arith.constant 9.99999974E-6 : f32
    %22 = vector.broadcast %cst_12 : f32 to vector<8x1xf32>
    %23 = arith.addf %19, %22 : vector<8x1xf32>
    %24 = math.rsqrt %23 : vector<8x1xf32>
    %25 = vector.broadcast %24 : vector<8x1xf32> to vector<8x32xf32>
    %26 = arith.mulf %21, %25 : vector<8x32xf32>
    %27 = vector.broadcast %6 : vector<1x32xf32> to vector<8x32xf32>
    %28 = arith.mulf %27, %26 : vector<8x32xf32>
    %29 = vector.broadcast %8 : vector<1x32xf32> to vector<8x32xf32>
    %30 = arith.addf %28, %29 : vector<8x32xf32>
    %31 = arith.truncf %30 : vector<8x32xf32> to vector<8x32xbf16>
    %c0_13 = arith.constant 0 : index
    %c0_14 = arith.constant 0 : index
    %c0_15 = arith.constant 0 : index
    %32 = vector.load %arg5[%c0_13, %c0_14, %c0_15] : memref<1x32x32xbf16, #tpu.memory_space<vmem>>, vector<1x32x32xbf16>
    %33 = vector.shape_cast %32 : vector<1x32x32xbf16> to vector<32x32xbf16>
    %cst_16 = arith.constant dense<0.000000e+00> : vector<8x32xf32>
    %34 = tpu.matmul %31, %33, %cst_16 {dimension_numbers = #tpu.dot_dimension_numbers<[1], [0], [0], [1], [0, 0, 1, 1], [], []>} : vector<8x32xbf16>, vector<32x32xbf16>, vector<8x32xf32> -> vector<8x32xf32>
    %c0_17 = arith.constant 0 : index
    %c0_18 = arith.constant 0 : index
    %c0_19 = arith.constant 0 : index
    %35 = vector.load %arg6[%c0_17, %c0_18, %c0_19] : memref<1x32x32xbf16, #tpu.memory_space<vmem>>, vector<1x32x32xbf16>
    %36 = vector.shape_cast %35 : vector<1x32x32xbf16> to vector<32x32xbf16>
    %cst_20 = arith.constant dense<0.000000e+00> : vector<8x32xf32>
    %37 = tpu.matmul %31, %36, %cst_20 {dimension_numbers = #tpu.dot_dimension_numbers<[1], [0], [0], [1], [0, 0, 1, 1], [], []>} : vector<8x32xbf16>, vector<32x32xbf16>, vector<8x32xf32> -> vector<8x32xf32>
    %c0_21 = arith.constant 0 : index
    %c0_22 = arith.constant 0 : index
    %c0_23 = arith.constant 0 : index
    %38 = vector.load %arg7[%c0_21, %c0_22, %c0_23] : memref<1x32x32xbf16, #tpu.memory_space<vmem>>, vector<1x32x32xbf16>
    %39 = vector.shape_cast %38 : vector<1x32x32xbf16> to vector<32x32xbf16>
    %cst_24 = arith.constant dense<0.000000e+00> : vector<8x32xf32>
    %40 = tpu.matmul %31, %39, %cst_24 {dimension_numbers = #tpu.dot_dimension_numbers<[1], [0], [0], [1], [0, 0, 1, 1], [], []>} : vector<8x32xbf16>, vector<32x32xbf16>, vector<8x32xf32> -> vector<8x32xf32>
    %41 = arith.truncf %34 : vector<8x32xf32> to vector<8x32xbf16>
    %42 = arith.truncf %37 : vector<8x32xf32> to vector<8x32xbf16>
    %43 = arith.truncf %40 : vector<8x32xf32> to vector<8x32xbf16>
    %44 = tpu.iota {dimensions = array<i32: 0>} : vector<8x8xi32>
    %45 = tpu.iota {dimensions = array<i32: 1>} : vector<8x8xi32>
    %46 = arith.cmpi sgt, %45, %44 : vector<8x8xi32>
    %cst_25 = arith.constant -1.000000e+30 : f32
    %cst_26 = arith.constant 0.000000e+00 : f32
    %47 = vector.broadcast %cst_25 : f32 to vector<8x8xf32>
    %48 = vector.broadcast %cst_26 : f32 to vector<8x8xf32>
    %49 = arith.select %46, %47, %48 : vector<8x8xi1>, vector<8x8xf32>
    %50 = vector.extract_strided_slice %41 {offsets = [0, 0], sizes = [8, 8], strides = [1, 1]} : vector<8x32xbf16> to vector<8x8xbf16>
    %51 = vector.extract_strided_slice %42 {offsets = [0, 0], sizes = [8, 8], strides = [1, 1]} : vector<8x32xbf16> to vector<8x8xbf16>
    %52 = vector.extract_strided_slice %43 {offsets = [0, 0], sizes = [8, 8], strides = [1, 1]} : vector<8x32xbf16> to vector<8x8xbf16>
    "tpu.trace_start"() <{level = 10 : i32, message = "qe,ke->qk"}> : () -> ()
    %cst_27 = arith.constant dense<0.000000e+00> : vector<8x8xf32>
    %53 = tpu.matmul %50, %51, %cst_27 {dimension_numbers = #tpu.dot_dimension_numbers<[1], [1], [0], [0], [0, 0, 1, 0], [], []>} : vector<8x8xbf16>, vector<8x8xbf16>, vector<8x8xf32> -> vector<8x8xf32>
    "tpu.trace_stop"() : () -> ()
    %54 = arith.addf %53, %49 : vector<8x8xf32>
    %cst_28 = arith.constant dense<0xFF800000> : vector<8xf32>
    %55 = vector.multi_reduction <maximumf>, %54, %cst_28 [1] : vector<8x8xf32> to vector<8xf32>
    %56 = vector.shape_cast %55 : vector<8xf32> to vector<8x1xf32>
    %57 = vector.broadcast %56 : vector<8x1xf32> to vector<8x8xf32>
    %58 = arith.subf %54, %57 : vector<8x8xf32>
    %59 = math.exp %58 : vector<8x8xf32>
    %cst_29 = arith.constant dense<0.000000e+00> : vector<8xf32>
    %60 = vector.multi_reduction <add>, %59, %cst_29 [1] : vector<8x8xf32> to vector<8xf32>
    %61 = vector.shape_cast %60 : vector<8xf32> to vector<8x1xf32>
    %62 = tpu.reciprocal %61 {approx = true} : vector<8x1xf32> -> vector<8x1xf32>
    %63 = vector.broadcast %62 : vector<8x1xf32> to vector<8x8xf32>
    %64 = arith.mulf %59, %63 : vector<8x8xf32>
    %65 = arith.truncf %64 : vector<8x8xf32> to vector<8x8xbf16>
    %cst_30 = arith.constant dense<0.000000e+00> : vector<8x8xf32>
    %66 = tpu.matmul %65, %52, %cst_30 {dimension_numbers = #tpu.dot_dimension_numbers<[1], [0], [0], [1], [0, 0, 1, 1], [], []>} : vector<8x8xbf16>, vector<8x8xbf16>, vector<8x8xf32> -> vector<8x8xf32>
    %67 = vector.extract_strided_slice %41 {offsets = [0, 8], sizes = [8, 8], strides = [1, 1]} : vector<8x32xbf16> to vector<8x8xbf16>
    %68 = vector.extract_strided_slice %42 {offsets = [0, 8], sizes = [8, 8], strides = [1, 1]} : vector<8x32xbf16> to vector<8x8xbf16>
    %69 = vector.extract_strided_slice %43 {offsets = [0, 8], sizes = [8, 8], strides = [1, 1]} : vector<8x32xbf16> to vector<8x8xbf16>
    "tpu.trace_start"() <{level = 10 : i32, message = "qe,ke->qk"}> : () -> ()
    %cst_31 = arith.constant dense<0.000000e+00> : vector<8x8xf32>
    %70 = tpu.matmul %67, %68, %cst_31 {dimension_numbers = #tpu.dot_dimension_numbers<[1], [1], [0], [0], [0, 0, 1, 0], [], []>} : vector<8x8xbf16>, vector<8x8xbf16>, vector<8x8xf32> -> vector<8x8xf32>
    "tpu.trace_stop"() : () -> ()
    %71 = arith.addf %70, %49 : vector<8x8xf32>
    %cst_32 = arith.constant dense<0xFF800000> : vector<8xf32>
    %72 = vector.multi_reduction <maximumf>, %71, %cst_32 [1] : vector<8x8xf32> to vector<8xf32>
    %73 = vector.shape_cast %72 : vector<8xf32> to vector<8x1xf32>
    %74 = vector.broadcast %73 : vector<8x1xf32> to vector<8x8xf32>
    %75 = arith.subf %71, %74 : vector<8x8xf32>
    %76 = math.exp %75 : vector<8x8xf32>
    %cst_33 = arith.constant dense<0.000000e+00> : vector<8xf32>
    %77 = vector.multi_reduction <add>, %76, %cst_33 [1] : vector<8x8xf32> to vector<8xf32>
    %78 = vector.shape_cast %77 : vector<8xf32> to vector<8x1xf32>
    %79 = tpu.reciprocal %78 {approx = true} : vector<8x1xf32> -> vector<8x1xf32>
    %80 = vector.broadcast %79 : vector<8x1xf32> to vector<8x8xf32>
    %81 = arith.mulf %76, %80 : vector<8x8xf32>
    %82 = arith.truncf %81 : vector<8x8xf32> to vector<8x8xbf16>
    %cst_34 = arith.constant dense<0.000000e+00> : vector<8x8xf32>
    %83 = tpu.matmul %82, %69, %cst_34 {dimension_numbers = #tpu.dot_dimension_numbers<[1], [0], [0], [1], [0, 0, 1, 1], [], []>} : vector<8x8xbf16>, vector<8x8xbf16>, vector<8x8xf32> -> vector<8x8xf32>
    %84 = vector.extract_strided_slice %41 {offsets = [0, 16], sizes = [8, 8], strides = [1, 1]} : vector<8x32xbf16> to vector<8x8xbf16>
    %85 = vector.extract_strided_slice %42 {offsets = [0, 16], sizes = [8, 8], strides = [1, 1]} : vector<8x32xbf16> to vector<8x8xbf16>
    %86 = vector.extract_strided_slice %43 {offsets = [0, 16], sizes = [8, 8], strides = [1, 1]} : vector<8x32xbf16> to vector<8x8xbf16>
    "tpu.trace_start"() <{level = 10 : i32, message = "qe,ke->qk"}> : () -> ()
    %cst_35 = arith.constant dense<0.000000e+00> : vector<8x8xf32>
    %87 = tpu.matmul %84, %85, %cst_35 {dimension_numbers = #tpu.dot_dimension_numbers<[1], [1], [0], [0], [0, 0, 1, 0], [], []>} : vector<8x8xbf16>, vector<8x8xbf16>, vector<8x8xf32> -> vector<8x8xf32>
    "tpu.trace_stop"() : () -> ()
    %88 = arith.addf %87, %49 : vector<8x8xf32>
    %cst_36 = arith.constant dense<0xFF800000> : vector<8xf32>
    %89 = vector.multi_reduction <maximumf>, %88, %cst_36 [1] : vector<8x8xf32> to vector<8xf32>
    %90 = vector.shape_cast %89 : vector<8xf32> to vector<8x1xf32>
    %91 = vector.broadcast %90 : vector<8x1xf32> to vector<8x8xf32>
    %92 = arith.subf %88, %91 : vector<8x8xf32>
    %93 = math.exp %92 : vector<8x8xf32>
    %cst_37 = arith.constant dense<0.000000e+00> : vector<8xf32>
    %94 = vector.multi_reduction <add>, %93, %cst_37 [1] : vector<8x8xf32> to vector<8xf32>
    %95 = vector.shape_cast %94 : vector<8xf32> to vector<8x1xf32>
    %96 = tpu.reciprocal %95 {approx = true} : vector<8x1xf32> -> vector<8x1xf32>
    %97 = vector.broadcast %96 : vector<8x1xf32> to vector<8x8xf32>
    %98 = arith.mulf %93, %97 : vector<8x8xf32>
    %99 = arith.truncf %98 : vector<8x8xf32> to vector<8x8xbf16>
    %cst_38 = arith.constant dense<0.000000e+00> : vector<8x8xf32>
    %100 = tpu.matmul %99, %86, %cst_38 {dimension_numbers = #tpu.dot_dimension_numbers<[1], [0], [0], [1], [0, 0, 1, 1], [], []>} : vector<8x8xbf16>, vector<8x8xbf16>, vector<8x8xf32> -> vector<8x8xf32>
    %101 = vector.extract_strided_slice %41 {offsets = [0, 24], sizes = [8, 8], strides = [1, 1]} : vector<8x32xbf16> to vector<8x8xbf16>
    %102 = vector.extract_strided_slice %42 {offsets = [0, 24], sizes = [8, 8], strides = [1, 1]} : vector<8x32xbf16> to vector<8x8xbf16>
    %103 = vector.extract_strided_slice %43 {offsets = [0, 24], sizes = [8, 8], strides = [1, 1]} : vector<8x32xbf16> to vector<8x8xbf16>
    "tpu.trace_start"() <{level = 10 : i32, message = "qe,ke->qk"}> : () -> ()
    %cst_39 = arith.constant dense<0.000000e+00> : vector<8x8xf32>
    %104 = tpu.matmul %101, %102, %cst_39 {dimension_numbers = #tpu.dot_dimension_numbers<[1], [1], [0], [0], [0, 0, 1, 0], [], []>} : vector<8x8xbf16>, vector<8x8xbf16>, vector<8x8xf32> -> vector<8x8xf32>
    "tpu.trace_stop"() : () -> ()
    %105 = arith.addf %104, %49 : vector<8x8xf32>
    %cst_40 = arith.constant dense<0xFF800000> : vector<8xf32>
    %106 = vector.multi_reduction <maximumf>, %105, %cst_40 [1] : vector<8x8xf32> to vector<8xf32>
    %107 = vector.shape_cast %106 : vector<8xf32> to vector<8x1xf32>
    %108 = vector.broadcast %107 : vector<8x1xf32> to vector<8x8xf32>
    %109 = arith.subf %105, %108 : vector<8x8xf32>
    %110 = math.exp %109 : vector<8x8xf32>
    %cst_41 = arith.constant dense<0.000000e+00> : vector<8xf32>
    %111 = vector.multi_reduction <add>, %110, %cst_41 [1] : vector<8x8xf32> to vector<8xf32>
    %112 = vector.shape_cast %111 : vector<8xf32> to vector<8x1xf32>
    %113 = tpu.reciprocal %112 {approx = true} : vector<8x1xf32> -> vector<8x1xf32>
    %114 = vector.broadcast %113 : vector<8x1xf32> to vector<8x8xf32>
    %115 = arith.mulf %110, %114 : vector<8x8xf32>
    %116 = arith.truncf %115 : vector<8x8xf32> to vector<8x8xbf16>
    %cst_42 = arith.constant dense<0.000000e+00> : vector<8x8xf32>
    %117 = tpu.matmul %116, %103, %cst_42 {dimension_numbers = #tpu.dot_dimension_numbers<[1], [0], [0], [1], [0, 0, 1, 1], [], []>} : vector<8x8xbf16>, vector<8x8xbf16>, vector<8x8xf32> -> vector<8x8xf32>
    %118 = tpu.concatenate %66, %83, %100, %117 in 1 : vector<8x8xf32>, vector<8x8xf32>, vector<8x8xf32>, vector<8x8xf32> -> vector<8x32xf32>
    %119 = arith.truncf %118 : vector<8x32xf32> to vector<8x32xbf16>
    %c0_43 = arith.constant 0 : index
    %c0_44 = arith.constant 0 : index
    %c0_45 = arith.constant 0 : index
    %120 = vector.load %arg8[%c0_43, %c0_44, %c0_45] : memref<1x32x32xbf16, #tpu.memory_space<vmem>>, vector<1x32x32xbf16>
    %121 = vector.shape_cast %120 : vector<1x32x32xbf16> to vector<32x32xbf16>
    %cst_46 = arith.constant dense<0.000000e+00> : vector<8x32xf32>
    %122 = tpu.matmul %119, %121, %cst_46 {dimension_numbers = #tpu.dot_dimension_numbers<[1], [0], [0], [1], [0, 0, 1, 1], [], []>} : vector<8x32xbf16>, vector<32x32xbf16>, vector<8x32xf32> -> vector<8x32xf32>
    %c0_47 = arith.constant 0 : index
    %c0_48 = arith.constant 0 : index
    %c0_49 = arith.constant 0 : index
    %123 = vector.load %arg9[%c0_47, %c0_48, %c0_49] : memref<1x1x32xf32, #tpu.memory_space<vmem>>, vector<1x1x32xf32>
    %124 = vector.shape_cast %123 : vector<1x1x32xf32> to vector<1x32xf32>
    %125 = vector.broadcast %124 : vector<1x32xf32> to vector<8x32xf32>
    %126 = arith.addf %122, %125 : vector<8x32xf32>
    %127 = arith.addf %4, %126 : vector<8x32xf32>
    %c0_50 = arith.constant 0 : index
    %c0_51 = arith.constant 0 : index
    %c0_52 = arith.constant 0 : index
    %128 = vector.load %arg10[%c0_50, %c0_51, %c0_52] : memref<1x1x32xf32, #tpu.memory_space<vmem>>, vector<1x1x32xf32>
    %129 = vector.shape_cast %128 : vector<1x1x32xf32> to vector<1x32xf32>
    %c0_53 = arith.constant 0 : index
    %c0_54 = arith.constant 0 : index
    %c0_55 = arith.constant 0 : index
    %130 = vector.load %arg11[%c0_53, %c0_54, %c0_55] : memref<1x1x32xf32, #tpu.memory_space<vmem>>, vector<1x1x32xf32>
    %131 = vector.shape_cast %130 : vector<1x1x32xf32> to vector<1x32xf32>
    %cst_56 = arith.constant dense<0.000000e+00> : vector<8xf32>
    %132 = vector.multi_reduction <add>, %127, %cst_56 [1] : vector<8x32xf32> to vector<8xf32>
    %133 = vector.shape_cast %132 : vector<8xf32> to vector<8x1xf32>
    %cst_57 = arith.constant 3.200000e+01 : f32
    %134 = vector.broadcast %cst_57 : f32 to vector<8x1xf32>
    %135 = arith.divf %133, %134 : vector<8x1xf32>
    %136 = vector.broadcast %135 : vector<8x1xf32> to vector<8x32xf32>
    %137 = arith.subf %127, %136 : vector<8x32xf32>
    %138 = arith.mulf %137, %137 : vector<8x32xf32>
    %cst_58 = arith.constant dense<0.000000e+00> : vector<8xf32>
    %139 = vector.multi_reduction <add>, %138, %cst_58 [1] : vector<8x32xf32> to vector<8xf32>
    %140 = vector.shape_cast %139 : vector<8xf32> to vector<8x1xf32>
    %cst_59 = arith.constant 3.200000e+01 : f32
    %141 = vector.broadcast %cst_59 : f32 to vector<8x1xf32>
    %142 = arith.divf %140, %141 : vector<8x1xf32>
    %143 = vector.broadcast %135 : vector<8x1xf32> to vector<8x32xf32>
    %144 = arith.subf %127, %143 : vector<8x32xf32>
    %cst_60 = arith.constant 9.99999974E-6 : f32
    %145 = vector.broadcast %cst_60 : f32 to vector<8x1xf32>
    %146 = arith.addf %142, %145 : vector<8x1xf32>
    %147 = math.rsqrt %146 : vector<8x1xf32>
    %148 = vector.broadcast %147 : vector<8x1xf32> to vector<8x32xf32>
    %149 = arith.mulf %144, %148 : vector<8x32xf32>
    %150 = vector.broadcast %129 : vector<1x32xf32> to vector<8x32xf32>
    %151 = arith.mulf %150, %149 : vector<8x32xf32>
    %152 = vector.broadcast %131 : vector<1x32xf32> to vector<8x32xf32>
    %153 = arith.addf %151, %152 : vector<8x32xf32>
    %154 = arith.truncf %153 : vector<8x32xf32> to vector<8x32xbf16>
    %c0_61 = arith.constant 0 : index
    %c0_62 = arith.constant 0 : index
    %c0_63 = arith.constant 0 : index
    %155 = vector.load %arg12[%c0_61, %c0_62, %c0_63] : memref<1x32x128xbf16, #tpu.memory_space<vmem>>, vector<1x32x128xbf16>
    %156 = vector.shape_cast %155 : vector<1x32x128xbf16> to vector<32x128xbf16>
    %cst_64 = arith.constant dense<0.000000e+00> : vector<8x128xf32>
    %157 = tpu.matmul %154, %156, %cst_64 {dimension_numbers = #tpu.dot_dimension_numbers<[1], [0], [0], [1], [0, 0, 1, 1], [], []>} : vector<8x32xbf16>, vector<32x128xbf16>, vector<8x128xf32> -> vector<8x128xf32>
    %c0_65 = arith.constant 0 : index
    %c0_66 = arith.constant 0 : index
    %c0_67 = arith.constant 0 : index
    %158 = vector.load %arg13[%c0_65, %c0_66, %c0_67] : memref<1x1x128xf32, #tpu.memory_space<vmem>>, vector<1x1x128xf32>
    %159 = vector.shape_cast %158 : vector<1x1x128xf32> to vector<1x128xf32>
    %160 = vector.broadcast %159 : vector<1x128xf32> to vector<8x128xf32>
    %161 = arith.addf %157, %160 : vector<8x128xf32>
    %cst_68 = arith.constant 5.000000e-01 : f32
    %162 = vector.broadcast %cst_68 : f32 to vector<8x128xf32>
    %163 = arith.mulf %162, %161 : vector<8x128xf32>
    %164 = arith.mulf %161, %161 : vector<8x128xf32>
    %165 = arith.mulf %161, %164 : vector<8x128xf32>
    %cst_69 = arith.constant 4.471500e-02 : f32
    %166 = vector.broadcast %cst_69 : f32 to vector<8x128xf32>
    %167 = arith.mulf %166, %165 : vector<8x128xf32>
    %168 = arith.addf %161, %167 : vector<8x128xf32>
    %cst_70 = arith.constant 0.797884583 : f32
    %169 = vector.broadcast %cst_70 : f32 to vector<8x128xf32>
    %170 = arith.mulf %169, %168 : vector<8x128xf32>
    %171 = math.tanh %170 : vector<8x128xf32>
    %cst_71 = arith.constant 1.000000e+00 : f32
    %172 = vector.broadcast %cst_71 : f32 to vector<8x128xf32>
    %173 = arith.addf %172, %171 : vector<8x128xf32>
    %174 = arith.mulf %163, %173 : vector<8x128xf32>
    %175 = arith.truncf %174 : vector<8x128xf32> to vector<8x128xbf16>
    %c0_72 = arith.constant 0 : index
    %c0_73 = arith.constant 0 : index
    %c0_74 = arith.constant 0 : index
    %176 = vector.load %arg14[%c0_72, %c0_73, %c0_74] : memref<1x128x32xbf16, #tpu.memory_space<vmem>>, vector<1x128x32xbf16>
    %177 = vector.shape_cast %176 : vector<1x128x32xbf16> to vector<128x32xbf16>
    %cst_75 = arith.constant dense<0.000000e+00> : vector<8x32xf32>
    %178 = tpu.matmul %175, %177, %cst_75 {dimension_numbers = #tpu.dot_dimension_numbers<[1], [0], [0], [1], [0, 0, 1, 1], [], []>} : vector<8x128xbf16>, vector<128x32xbf16>, vector<8x32xf32> -> vector<8x32xf32>
    %c0_76 = arith.constant 0 : index
    %c0_77 = arith.constant 0 : index
    %c0_78 = arith.constant 0 : index
    %179 = vector.load %arg15[%c0_76, %c0_77, %c0_78] : memref<1x1x32xf32, #tpu.memory_space<vmem>>, vector<1x1x32xf32>
    %180 = vector.shape_cast %179 : vector<1x1x32xf32> to vector<1x32xf32>
    %181 = vector.broadcast %180 : vector<1x32xf32> to vector<8x32xf32>
    %182 = arith.addf %178, %181 : vector<8x32xf32>
    %183 = arith.addf %127, %182 : vector<8x32xf32>
    %c0_79 = arith.constant 0 : index
    %c0_80 = arith.constant 0 : index
    %c0_81 = arith.constant 0 : index
    %184 = vector.load %arg16[%c0_79, %c0_80, %c0_81] : memref<1x8x32xf32, #tpu.memory_space<vmem>>, vector<1x8x32xf32>
    %185 = vector.shape_cast %184 : vector<1x8x32xf32> to vector<8x32xf32>
    %186 = vector.shape_cast %183 : vector<8x32xf32> to vector<1x8x32xf32>
    tpu.vector_store %arg16[%c0_79, %c0_80, %c0_81], %186 {strides = array<i32>} : memref<1x8x32xf32, #tpu.memory_space<vmem>>, vector<1x8x32xf32>,
    return
  }
  func.func @transform_0(%arg0: i32, %arg1: i32) -> (i32, i32, i32) {
    %c0_i32 = arith.constant 0 : i32
    %c0_i32_0 = arith.constant 0 : i32
    %c0_i32_1 = arith.constant 0 : i32
    return %arg0, %c0_i32, %c0_i32_0 : i32, i32, i32
  }
  func.func @transform_1(%arg0: i32, %arg1: i32) -> (i32, i32, i32) {
    %c0_i32 = arith.constant 0 : i32
    %c0_i32_0 = arith.constant 0 : i32
    %c0_i32_1 = arith.constant 0 : i32
    return %arg1, %c0_i32, %c0_i32_0 : i32, i32, i32
  }
  func.func @transform_2(%arg0: i32, %arg1: i32) -> (i32, i32, i32) {
    %c0_i32 = arith.constant 0 : i32
    %c0_i32_0 = arith.constant 0 : i32
    %c0_i32_1 = arith.constant 0 : i32
    return %arg1, %c0_i32, %c0_i32_0 : i32, i32, i32
  }
  func.func @transform_3(%arg0: i32, %arg1: i32) -> (i32, i32, i32) {
    %c0_i32 = arith.constant 0 : i32
    %c0_i32_0 = arith.constant 0 : i32
    %c0_i32_1 = arith.constant 0 : i32
    return %arg1, %c0_i32, %c0_i32_0 : i32, i32, i32
  }
  func.func @transform_4(%arg0: i32, %arg1: i32) -> (i32, i32, i32) {
    %c0_i32 = arith.constant 0 : i32
    %c0_i32_0 = arith.constant 0 : i32
    %c0_i32_1 = arith.constant 0 : i32
    return %arg1, %c0_i32, %c0_i32_0 : i32, i32, i32
  }
  func.func @transform_5(%arg0: i32, %arg1: i32) -> (i32, i32, i32) {
    %c0_i32 = arith.constant 0 : i32
    %c0_i32_0 = arith.constant 0 : i32
    %c0_i32_1 = arith.constant 0 : i32
    return %arg1, %c0_i32, %c0_i32_0 : i32, i32, i32
  }
  func.func @transform_6(%arg0: i32, %arg1: i32) -> (i32, i32, i32) {
    %c0_i32 = arith.constant 0 : i32
    %c0_i32_0 = arith.constant 0 : i32
    %c0_i32_1 = arith.constant 0 : i32
    return %arg1, %c0_i32, %c0_i32_0 : i32, i32, i32
  }
  func.func @transform_7(%arg0: i32, %arg1: i32) -> (i32, i32, i32) {
    %c0_i32 = arith.constant 0 : i32
    %c0_i32_0 = arith.constant 0 : i32
    %c0_i32_1 = arith.constant 0 : i32
    return %arg1, %c0_i32, %c0_i32_0 : i32, i32, i32
  }
  func.func @transform_8(%arg0: i32, %arg1: i32) -> (i32, i32, i32) {
    %c0_i32 = arith.constant 0 : i32
    %c0_i32_0 = arith.constant 0 : i32
    %c0_i32_1 = arith.constant 0 : i32
    return %arg1, %c0_i32, %c0_i32_0 : i32, i32, i32
  }
  func.func @transform_9(%arg0: i32, %arg1: i32) -> (i32, i32, i32) {
    %c0_i32 = arith.constant 0 : i32
    %c0_i32_0 = arith.constant 0 : i32
    %c0_i32_1 = arith.constant 0 : i32
    return %arg1, %c0_i32, %c0_i32_0 : i32, i32, i32
  }
  func.func @transform_10(%arg0: i32, %arg1: i32) -> (i32, i32, i32) {
    %c0_i32 = arith.constant 0 : i32
    %c0_i32_0 = arith.constant 0 : i32
    %c0_i32_1 = arith.constant 0 : i32
    return %arg1, %c0_i32, %c0_i32_0 : i32, i32, i32
  }
  func.func @transform_11(%arg0: i32, %arg1: i32) -> (i32, i32, i32) {
    %c0_i32 = arith.constant 0 : i32
    %c0_i32_0 = arith.constant 0 : i32
    %c0_i32_1 = arith.constant 0 : i32
    return %arg1, %c0_i32, %c0_i32_0 : i32, i32, i32
  }
  func.func @transform_12(%arg0: i32, %arg1: i32) -> (i32, i32, i32) {
    %c0_i32 = arith.constant 0 : i32
    %c0_i32_0 = arith.constant 0 : i32
    %c0_i32_1 = arith.constant 0 : i32
    return %arg1, %c0_i32, %c0_i32_0 : i32, i32, i32
  }
  func.func @transform_13(%arg0: i32, %arg1: i32) -> (i32, i32, i32) {
    %c0_i32 = arith.constant 0 : i32
    %c0_i32_0 = arith.constant 0 : i32
    %c0_i32_1 = arith.constant 0 : i32
    return %arg1, %c0_i32, %c0_i32_0 : i32, i32, i32
  }
  func.func @transform_14(%arg0: i32, %arg1: i32) -> (i32, i32, i32) {
    %c0_i32 = arith.constant 0 : i32
    %c0_i32_0 = arith.constant 0 : i32
    %c0_i32_1 = arith.constant 0 : i32
    return %arg0, %c0_i32, %c0_i32_0 : i32, i32, i32
  }
}

</mosaic_0001>

<llo_original>
// kernel: gpt_forward.3
$region0: #{gpt_forward.3}
  #allocation0 [shape = 'u32[]', space=smem, size = 0x4, offset = 0x4, fixed_abs, tag = 'smem constant byte address 0x4 - core index']
  #allocation1 [shape = 'u32[144,128]{1,0:T(1,128)}', space=vmem, size = 0x12000, scoped, tag = 'internal scratch']
  %s0 = inlined_call_operand.vmem [shape: f32[16,32], index: 0, kind: input, shape index: {}]
  %s1 = inlined_call_operand.vmem [shape: f32[1,32], index: 1, kind: input, shape index: {}]
  %s2 = inlined_call_operand.vmem [shape: f32[1,32], index: 2, kind: input, shape index: {}]
  %s3 = inlined_call_operand.vmem [shape: bf16[32,128], index: 3, kind: input, shape index: {}]
  %s4 = inlined_call_operand.hbm [shape: f32[16,128], index: 4, kind: output, shape index: {}]
  %s5 = sld [smem:[#allocation0]]
  $region26: #{gpt_forward.3} parent=0
    _
  %s7 = ssub.s32 1, %s5
  %s8 = scalar_select 0, %s7, %s5
  $region1: #{gpt_forward.3} parent=0
    #allocation2 [shape = 'u8[8192]{0}', space=vmem, size = 0x2000, scoped, tag = 'output window, operand 0, single buffered']
    #allocation3 [shape = 's32[1]{0}', space=sflag, size = 0x4, scoped, tag = 'scoped memory for gpt_forward.3']
    %9 = vsyncpa [#allocation3], 0
    // Predicated region
    $region2: #{gpt_forward.3} parent=1 // pred_check
      _
    $region3: #{gpt_forward.3} parent=1 // pred_check_branch
      %11 = sbr.rel (0) target = $region5
    $region4: #{gpt_forward.3} parent=1 // pred_region
      _
    $region5: #{gpt_forward.3} parent=1 // pred_fallthru
      _
    // Predicated region
    $region6: #{gpt_forward.3} parent=1 // pred_check
      _
    $region7: #{gpt_forward.3} parent=1 // pred_check_branch
      %13 = sbr.rel (0) target = $region9
    $region8: #{gpt_forward.3} parent=1 // pred_region
      _
    $region9: #{gpt_forward.3} parent=1 // pred_fallthru
      _
    // Predicated region
    $region10: #{gpt_forward.3} parent=1 // pred_check
      _
    $region11: #{gpt_forward.3} parent=1 // pred_check_branch
      %15 = sbr.rel (0) target = $region13
    $region12: #{gpt_forward.3} parent=1 // pred_region
      _
    $region13: #{gpt_forward.3} parent=1 // pred_fallthru
      _
    // Predicated region
    $region14: #{gpt_forward.3} parent=1 // pred_check
      _
    $region15: #{gpt_forward.3} parent=1 // pred_check_branch
      %17 = sbr.rel (0) target = $region17
    $region16: #{gpt_forward.3} parent=1 // pred_region
      _
    $region17: #{gpt_forward.3} parent=1 // pred_fallthru
      _
    %v19 = vld [vmem:[%s0] sm:$0xff]
    %v20 = vld [vmem:[%s0 + $0x8] sm:$0xff]
    %v21 = vld [vmem:[%s1] sm:$0x1]
    %v22 = vld [vmem:[%s2] sm:$0x1]
    %vm23 = vcmask 261120
    %v24 = vsel %vm23, %v19, 0.0
    %25 = vadd.xlane.f32.xlu0 %v24
    %v26 = vpop.xlane.xlu0 %25
    %v27 = vsel %vm23, %v20, 0.0
    %28 = vadd.xlane.f32.xlu0 %v27
    %v29 = vpop.xlane.xlu0 %28
    %v30 = vrcp.pop 32.0
    %v31 = vmul.f32 %v26, %v30
    %v32 = vmul.f32 %v29, %v30
    %v33 = vsub.f32 %v19, %v31
    %v34 = vsub.f32 %v20, %v32
    %v35 = vmul.f32 %v33, %v33
    %v36 = vmul.f32 %v34, %v34
    %v37 = vsel %vm23, %v35, 0.0
    %38 = vadd.xlane.f32.xlu0 %v37
    %v39 = vpop.xlane.xlu0 %38
    %v40 = vsel %vm23, %v36, 0.0
    %41 = vadd.xlane.f32.xlu0 %v40
    %v42 = vpop.xlane.xlu0 %41
    %v43 = vmul.f32 %v39, %v30
    %v44 = vmul.f32 %v42, %v30
    %v45 = vadd.f32 %v43, 1e-05
    %v46 = vadd.f32 %v44, 1e-05
    %v47 = vrsqrt.pop %v45
    %v48 = vrsqrt.pop %v46
    %v49 = vmul.f32 %v33, %v47
    %v50 = vmul.f32 %v34, %v48
    %v52 = vlaneseq
    %v53 = vshrl.u32 %v52, 7
    %v54 = vsub.s32 0, %v53
    %v55 = vrot.slane %v21, %v54
    %v57 = vmul.f32 %v55, %v49
    %v58 = vmul.f32 %v55, %v50
    %v60 = vlaneseq
    %v61 = vshrl.u32 %v60, 7
    %v62 = vsub.s32 0, %v61
    %v63 = vrot.slane %v22, %v62
    %v65 = vadd.f32 %v57, %v63
    %v66 = vadd.f32 %v58, %v63
    %v67 = vpack.c.bf16 %v66, %v65
    %v68 = vld [vmem:[%s3] sm:$0xf]
    %v69 = vld [vmem:[%s3 + $0x4] sm:$0xf]
    %v70 = vld [vmem:[%s3 + $0x8] sm:$0xf]
    %v71 = vld [vmem:[%s3 + $0xc] sm:$0xf]
    %v76 = vunpack.c.l.b16 %v68
    %v77 = vunpack.c.l.b16 %v69
    %v78 = vunpack.c.l.b16 %v70
    %v79 = vunpack.c.l.b16 %v71
    %v80 = vpack.c.b16 %v77, %v76
    %v81 = vpack.c.b16 %v79, %v78
    %v85 = vsel %vm23, %v67, 0
    %87 = vmatprep.subr.bf16.mxu0 0
    %88 = vmatpush1.bf16.msra.mxu0 %v80
    %89 = vmatprep.subr.bf16.mxu0 0
    %90 = vmatpush1.bf16.msra.mxu0 %v81
    %91 = vmatprep.subr.bf16.mxu0 0
    %92 = vmatpush1.bf16.msra.mxu0 0
    %93 = vmatprep.subr.bf16.mxu0 0
    %94 = vmatpush1.bf16.msra.mxu0 0
    %95 = vmatprep.subr.bf16.mxu0 0
    %96 = vmatpush1.bf16.msra.mxu0 0
    %97 = vmatprep.subr.bf16.mxu0 0
    %98 = vmatpush1.bf16.msra.mxu0 0
    %99 = vmatprep.subr.bf16.mxu0 0
    %100 = vmatpush1.bf16.msra.mxu0 0
    %101 = vmatprep.subr.bf16.mxu0 0
    %102 = vmatpush1.bf16.msra.mxu0 0
    %103 = vmatprep.subr.bf16.mxu0 0
    %104 = vmatpush1.bf16.msra.mxu0 0
    %105 = vmatprep.subr.bf16.mxu0 0
    %106 = vmatpush1.bf16.msra.mxu0 0
    %107 = vmatprep.subr.bf16.mxu0 0
    %108 = vmatpush1.bf16.msra.mxu0 0
    %109 = vmatprep.subr.bf16.mxu0 0
    %110 = vmatpush1.bf16.msra.mxu0 0
    %111 = vmatprep.subr.bf16.mxu0 0
    %112 = vmatpush1.bf16.msra.mxu0 0
    %113 = vmatprep.subr.bf16.mxu0 0
    %114 = vmatpush1.bf16.msra.mxu0 0
    %115 = vmatprep.subr.bf16.mxu0 0
    %116 = vmatpush1.bf16.msra.mxu0 0
    %117 = vmatprep.subr.bf16.mxu0 0
    %118 = vmatpush1.bf16.msra.mxu0 0
    %119 = vmatprep.mubr.bf16.mxu0 0
    %120 = vmatmul.mubr.bf16.gmra.mrb[0].mxu0 %v85
    %v121 = vpop.f32.mrb[0].mxu0
    %v122 = vadd.f32 0.0, %v121
    %v123 = vpop.f32.mrb[0].mxu0
    %v124 = vpop.f32.mrb[0].mxu0
    %v125 = vadd.f32 0.0, %v124
    %v126 = vpop.f32.mrb[0].mxu0
    %127 = vdwg.mxu0
    %128 = vst [vmem:[#allocation2] sm:$0xff] %v122
    %129 = vst [vmem:[#allocation2 + $0x8] sm:$0xff] %v125
    // Predicated region
    $region18: #{gpt_forward.3} parent=1 // pred_check
      _
    $region19: #{gpt_forward.3} parent=1 // pred_check_branch
      %131 = sbr.rel (0) target = $region21
    $region20: #{gpt_forward.3} parent=1 // pred_region
      %s133 = ssub.s32 256, 256
      %134 = vsyncadd [#allocation3], %s133
      %s135 = sshll.u32 [#allocation2], 4
      %s136 = int_to_ptr.vmem [resolvable:$true] %s135
      %141 = dma.vmem_to_hbm [thread:$0]  %s136, 256, %s4, [#allocation3], 128, 128, 8
    $region21: #{gpt_forward.3} parent=1 // pred_fallthru
      _
    // Predicated region
    $region22: #{gpt_forward.3} parent=1 // pred_check
      _
    $region23: #{gpt_forward.3} parent=1 // pred_check_branch
      %143 = sbr.rel (0) target = $region25
    $region24: #{gpt_forward.3} parent=1 // pred_region
      %144 = dma.done [#allocation3], 256
    $region25: #{gpt_forward.3} parent=1 // pred_fallthru
      _
    %145 = vsyncpa [#allocation3], 1

// kernel: gpt_forward.2
$region0: #{gpt_forward.2}
  #allocation0 [shape = 'u32[]', space=smem, size = 0x4, offset = 0x4, fixed_abs, tag = 'smem constant byte address 0x4 - core index']
  #allocation1 [shape = 'u32[144,128]{1,0:T(1,128)}', space=vmem, size = 0x12000, scoped, tag = 'internal scratch']
  %s0 = inlined_call_operand.vmem [shape: f32[2,8,32], index: 0, kind: input, shape index: {}]
  %s1 = inlined_call_operand.vmem [shape: f32[2,1,32], index: 1, kind: input, shape index: {}]
  %s2 = inlined_call_operand.vmem [shape: f32[2,1,32], index: 2, kind: input, shape index: {}]
  %s3 = inlined_call_operand.vmem [shape: bf16[2,32,32], index: 3, kind: input, shape index: {}]
  %s4 = inlined_call_operand.vmem [shape: bf16[2,32,32], index: 4, kind: input, shape index: {}]
  %s5 = inlined_call_operand.vmem [shape: bf16[2,32,32], index: 5, kind: input, shape index: {}]
  %s6 = inlined_call_operand.vmem [shape: bf16[2,32,32], index: 6, kind: input, shape index: {}]
  %s7 = inlined_call_operand.vmem [shape: f32[2,1,32], index: 7, kind: input, shape index: {}]
  %s8 = inlined_call_operand.vmem [shape: f32[2,1,32], index: 8, kind: input, shape index: {}]
  %s9 = inlined_call_operand.vmem [shape: f32[2,1,32], index: 9, kind: input, shape index: {}]
  %s10 = inlined_call_operand.vmem [shape: bf16[2,32,128], index: 10, kind: input, shape index: {}]
  %s11 = inlined_call_operand.vmem [shape: f32[2,1,128], index: 11, kind: input, shape index: {}]
  %s12 = inlined_call_operand.vmem [shape: bf16[2,128,32], index: 12, kind: input, shape index: {}]
  %s13 = inlined_call_operand.vmem [shape: f32[2,1,32], index: 13, kind: input, shape index: {}]
  %s14 = inlined_call_operand.vmem [shape: f32[2,8,32], index: 14, kind: output, shape index: {}]
  %s15 = sld [smem:[#allocation0]]
  $region93: #{gpt_forward.2} parent=0
    _
  %s17 = ssub.s32 1, %s15
  %s18 = scalar_select 0, %s17, %s15
  loop: start=0, step=1, limit=6
  $region2: #{gpt_forward.2} parent=0 // loop_pre_header
    _
  $region3: #{gpt_forward.2} parent=0 // loop_header
    %s20 = sphi 0, %s24
    %p21 = scmp.ge.s32.totalorder %s20, 6
    %s27 = sphi 0, %s39
    %s28 = sphi 0, %s35
    %s29 = sphi 0, %s27
    %s30 = sphi 0, %s28
    %s31 = sphi 0, %s29
    %s32 = sphi 0, %s30
    %s42 = sphi 0, %s44
    %s45 = sphi 0, %s42
    %s46 = sphi 0, %s45
    %s62 = sphi 0, %s46
    %s68 = sphi 0, %s70
    %s71 = sphi 0, %s68
    %s72 = sphi 0, %s71
    %s88 = sphi 0, %s72
    %s94 = sphi 0, %s96
    %s97 = sphi 0, %s94
    %s98 = sphi 0, %s97
    %s114 = sphi 0, %s98
    %s120 = sphi 0, %s122
    %s123 = sphi 0, %s120
    %s124 = sphi 0, %s123
    %s140 = sphi 0, %s124
    %s146 = sphi 0, %s148
    %s149 = sphi 0, %s146
    %s150 = sphi 0, %s149
    %s166 = sphi 0, %s150
    %s172 = sphi 0, %s174
    %s175 = sphi 0, %s172
    %s176 = sphi 0, %s175
    %s192 = sphi 0, %s176
    %s198 = sphi 0, %s200
    %s201 = sphi 0, %s198
    %s202 = sphi 0, %s201
    %s218 = sphi 0, %s202
    %s224 = sphi 0, %s226
    %s227 = sphi 0, %s224
    %s228 = sphi 0, %s227
    %s244 = sphi 0, %s228
    %s250 = sphi 0, %s252
    %s253 = sphi 0, %s250
    %s254 = sphi 0, %s253
    %s270 = sphi 0, %s254
    %s276 = sphi 0, %s278
    %s279 = sphi 0, %s276
    %s280 = sphi 0, %s279
    %s296 = sphi 0, %s280
    %s302 = sphi 0, %s304
    %s305 = sphi 0, %s302
    %s306 = sphi 0, %s305
    %s322 = sphi 0, %s306
    %s328 = sphi 0, %s330
    %s331 = sphi 0, %s328
    %s332 = sphi 0, %s331
    %s348 = sphi 0, %s332
    %s354 = sphi 0, %s356
    %s357 = sphi 0, %s354
    %s358 = sphi 0, %s357
    %s374 = sphi 0, %s358
    %s380 = sphi 0, %s382
    %s383 = sphi 0, %s380
    %s384 = sphi 0, %s383
    %s400 = sphi 0, %s384
    %s406 = sphi 0, %s408
    %s409 = sphi 0, %s406
    %s410 = sphi 0, %s409
    %s426 = sphi 0, %s410
  $region4: #{gpt_forward.2} parent=0 // loop_header_branch
    %23 = sbr.rel (%p21) target = $region8
  $region5: #{gpt_forward.2} parent=0 // loop_body
    %s25 = ssub.s32 %s20, 1
    %s26 = ssub.s32 %s20, 2
    %s33 = sadd.s32 1, %s28
    %p34 = scmp.ge.s32.totalorder %s33, 2
    %s35 = scalar_select %p34, 0, %s33
    %s36 = sadd.s32 1, %s27
    %s37 = scalar_select %p34, %s36, %s27
    %p38 = scmp.ge.s32.totalorder %s37, 2
    %s39 = scalar_select %p38, 0, %s37
    %s40 = ssub.s32 %s27, %s39
    %p41 = scmp.eq.s32.totalorder %s40, 0
    %s43 = sadd.s32 %s42, 1
    %s44 = scalar_select %p41, %s42, %s43
    %p47 = pneg %p41
    %p48 = scmp.eq.s32.totalorder %s20, 3
    %p49 = por %p47, %p48
    %p50 = scmp.ne.s32.totalorder %s42, %s45
    %p51 = scmp.eq.s32.totalorder %s20, 0
    %p52 = por %p50, %p51
    %p53 = scmp.ne.s32.totalorder %s42, %s45
    %p54 = scmp.eq.s32.totalorder %s25, 3
    %p55 = por %p53, %p54
    %p56 = scmp.ne.s32.totalorder %s45, %s46
    %p57 = scmp.eq.s32.totalorder %s25, 0
    %p58 = por %p56, %p57
    %p59 = scmp.ne.s32.totalorder %s45, %s46
    %p60 = scmp.eq.s32.totalorder %s26, 3
    %p61 = por %p59, %p60
    %p63 = scmp.ne.s32.totalorder %s46, %s62
    %p64 = scmp.eq.s32.totalorder %s26, 0
    %p65 = por %p63, %p64
    %s66 = ssub.s32 %s28, %s35
    %p67 = scmp.eq.s32.totalorder %s66, 0
    %s69 = sadd.s32 %s68, 1
    %s70 = scalar_select %p67, %s68, %s69
    %p73 = pneg %p67
    %p74 = scmp.eq.s32.totalorder %s20, 3
    %p75 = por %p73, %p74
    %p76 = scmp.ne.s32.totalorder %s68, %s71
    %p77 = scmp.eq.s32.totalorder %s20, 0
    %p78 = por %p76, %p77
    %p79 = scmp.ne.s32.totalorder %s68, %s71
    %p80 = scmp.eq.s32.totalorder %s25, 3
    %p81 = por %p79, %p80
    %p82 = scmp.ne.s32.totalorder %s71, %s72
    %p83 = scmp.eq.s32.totalorder %s25, 0
    %p84 = por %p82, %p83
    %p85 = scmp.ne.s32.totalorder %s71, %s72
    %p86 = scmp.eq.s32.totalorder %s26, 3
    %p87 = por %p85, %p86
    %p89 = scmp.ne.s32.totalorder %s72, %s88
    %p90 = scmp.eq.s32.totalorder %s26, 0
    %p91 = por %p89, %p90
    %s92 = ssub.s32 %s28, %s35
    %p93 = scmp.eq.s32.totalorder %s92, 0
    %s95 = sadd.s32 %s94, 1
    %s96 = scalar_select %p93, %s94, %s95
    %p99 = pneg %p93
    %p100 = scmp.eq.s32.totalorder %s20, 3
    %p101 = por %p99, %p100
    %p102 = scmp.ne.s32.totalorder %s94, %s97
    %p103 = scmp.eq.s32.totalorder %s20, 0
    %p104 = por %p102, %p103
    %p105 = scmp.ne.s32.totalorder %s94, %s97
    %p106 = scmp.eq.s32.totalorder %s25, 3
    %p107 = por %p105, %p106
    %p108 = scmp.ne.s32.totalorder %s97, %s98
    %p109 = scmp.eq.s32.totalorder %s25, 0
    %p110 = por %p108, %p109
    %p111 = scmp.ne.s32.totalorder %s97, %s98
    %p112 = scmp.eq.s32.totalorder %s26, 3
    %p113 = por %p111, %p112
    %p115 = scmp.ne.s32.totalorder %s98, %s114
    %p116 = scmp.eq.s32.totalorder %s26, 0
    %p117 = por %p115, %p116
    %s118 = ssub.s32 %s28, %s35
    %p119 = scmp.eq.s32.totalorder %s118, 0
    %s121 = sadd.s32 %s120, 1
    %s122 = scalar_select %p119, %s120, %s121
    %p125 = pneg %p119
    %p126 = scmp.eq.s32.totalorder %s20, 3
    %p127 = por %p125, %p126
    %p128 = scmp.ne.s32.totalorder %s120, %s123
    %p129 = scmp.eq.s32.totalorder %s20, 0
    %p130 = por %p128, %p129
    %p131 = scmp.ne.s32.totalorder %s120, %s123
    %p132 = scmp.eq.s32.totalorder %s25, 3
    %p133 = por %p131, %p132
    %p134 = scmp.ne.s32.totalorder %s123, %s124
    %p135 = scmp.eq.s32.totalorder %s25, 0
    %p136 = por %p134, %p135
    %p137 = scmp.ne.s32.totalorder %s123, %s124
    %p138 = scmp.eq.s32.totalorder %s26, 3
    %p139 = por %p137, %p138
    %p141 = scmp.ne.s32.totalorder %s124, %s140
    %p142 = scmp.eq.s32.totalorder %s26, 0
    %p143 = por %p141, %p142
    %s144 = ssub.s32 %s28, %s35
    %p145 = scmp.eq.s32.totalorder %s144, 0
    %s147 = sadd.s32 %s146, 1
    %s148 = scalar_select %p145, %s146, %s147
    %p151 = pneg %p145
    %p152 = scmp.eq.s32.totalorder %s20, 3
    %p153 = por %p151, %p152
    %p154 = scmp.ne.s32.totalorder %s146, %s149
    %p155 = scmp.eq.s32.totalorder %s20, 0
    %p156 = por %p154, %p155
    %p157 = scmp.ne.s32.totalorder %s146, %s149
    %p158 = scmp.eq.s32.totalorder %s25, 3
    %p159 = por %p157, %p158
    %p160 = scmp.ne.s32.totalorder %s149, %s150
    %p161 = scmp.eq.s32.totalorder %s25, 0
    %p162 = por %p160, %p161
    %p163 = scmp.ne.s32.totalorder %s149, %s150
    %p164 = scmp.eq.s32.totalorder %s26, 3
    %p165 = por %p163, %p164
    %p167 = scmp.ne.s32.totalorder %s150, %s166
    %p168 = scmp.eq.s32.totalorder %s26, 0
    %p169 = por %p167, %p168
    %s170 = ssub.s32 %s28, %s35
    %p171 = scmp.eq.s32.totalorder %s170, 0
    %s173 = sadd.s32 %s172, 1
    %s174 = scalar_select %p171, %s172, %s173
    %p177 = pneg %p171
    %p178 = scmp.eq.s32.totalorder %s20, 3
    %p179 = por %p177, %p178
    %p180 = scmp.ne.s32.totalorder %s172, %s175
    %p181 = scmp.eq.s32.totalorder %s20, 0
    %p182 = por %p180, %p181
    %p183 = scmp.ne.s32.totalorder %s172, %s175
    %p184 = scmp.eq.s32.totalorder %s25, 3
    %p185 = por %p183, %p184
    %p186 = scmp.ne.s32.totalorder %s175, %s176
    %p187 = scmp.eq.s32.totalorder %s25, 0
    %p188 = por %p186, %p187
    %p189 = scmp.ne.s32.totalorder %s175, %s176
    %p190 = scmp.eq.s32.totalorder %s26, 3
    %p191 = por %p189, %p190
    %p193 = scmp.ne.s32.totalorder %s176, %s192
    %p194 = scmp.eq.s32.totalorder %s26, 0
    %p195 = por %p193, %p194
    %s196 = ssub.s32 %s28, %s35
    %p197 = scmp.eq.s32.totalorder %s196, 0
    %s199 = sadd.s32 %s198, 1
    %s200 = scalar_select %p197, %s198, %s199
    %p203 = pneg %p197
    %p204 = scmp.eq.s32.totalorder %s20, 3
    %p205 = por %p203, %p204
    %p206 = scmp.ne.s32.totalorder %s198, %s201
    %p207 = scmp.eq.s32.totalorder %s20, 0
    %p208 = por %p206, %p207
    %p209 = scmp.ne.s32.totalorder %s198, %s201
    %p210 = scmp.eq.s32.totalorder %s25, 3
    %p211 = por %p209, %p210
    %p212 = scmp.ne.s32.totalorder %s201, %s202
    %p213 = scmp.eq.s32.totalorder %s25, 0
    %p214 = por %p212, %p213
    %p215 = scmp.ne.s32.totalorder %s201, %s202
    %p216 = scmp.eq.s32.totalorder %s26, 3
    %p217 = por %p215, %p216
    %p219 = scmp.ne.s32.totalorder %s202, %s218
    %p220 = scmp.eq.s32.totalorder %s26, 0
    %p221 = por %p219, %p220
    %s222 = ssub.s32 %s28, %s35
    %p223 = scmp.eq.s32.totalorder %s222, 0
    %s225 = sadd.s32 %s224, 1
    %s226 = scalar_select %p223, %s224, %s225
    %p229 = pneg %p223
    %p230 = scmp.eq.s32.totalorder %s20, 3
    %p231 = por %p229, %p230
    %p232 = scmp.ne.s32.totalorder %s224, %s227
    %p233 = scmp.eq.s32.totalorder %s20, 0
    %p234 = por %p232, %p233
    %p235 = scmp.ne.s32.totalorder %s224, %s227
    %p236 = scmp.eq.s32.totalorder %s25, 3
    %p237 = por %p235, %p236
    %p238 = scmp.ne.s32.totalorder %s227, %s228
    %p239 = scmp.eq.s32.totalorder %s25, 0
    %p240 = por %p238, %p239
    %p241 = scmp.ne.s32.totalorder %s227, %s228
    %p242 = scmp.eq.s32.totalorder %s26, 3
    %p243 = por %p241, %p242
    %p245 = scmp.ne.s32.totalorder %s228, %s244
    %p246 = scmp.eq.s32.totalorder %s26, 0
    %p247 = por %p245, %p246
    %s248 = ssub.s32 %s28, %s35
    %p249 = scmp.eq.s32.totalorder %s248, 0
    %s251 = sadd.s32 %s250, 1
    %s252 = scalar_select %p249, %s250, %s251
    %p255 = pneg %p249
    %p256 = scmp.eq.s32.totalorder %s20, 3
    %p257 = por %p255, %p256
    %p258 = scmp.ne.s32.totalorder %s250, %s253
    %p259 = scmp.eq.s32.totalorder %s20, 0
    %p260 = por %p258, %p259
    %p261 = scmp.ne.s32.totalorder %s250, %s253
    %p262 = scmp.eq.s32.totalorder %s25, 3
    %p263 = por %p261, %p262
    %p264 = scmp.ne.s32.totalorder %s253, %s254
    %p265 = scmp.eq.s32.totalorder %s25, 0
    %p266 = por %p264, %p265
    %p267 = scmp.ne.s32.totalorder %s253, %s254
    %p268 = scmp.eq.s32.totalorder %s26, 3
    %p269 = por %p267, %p268
    %p271 = scmp.ne.s32.totalorder %s254, %s270
    %p272 = scmp.eq.s32.totalorder %s26, 0
    %p273 = por %p271, %p272
    %s274 = ssub.s32 %s28, %s35
    %p275 = scmp.eq.s32.totalorder %s274, 0
    %s277 = sadd.s32 %s276, 1
    %s278 = scalar_select %p275, %s276, %s277
    %p281 = pneg %p275
    %p282 = scmp.eq.s32.totalorder %s20, 3
    %p283 = por %p281, %p282
    %p284 = scmp.ne.s32.totalorder %s276, %s279
    %p285 = scmp.eq.s32.totalorder %s20, 0
    %p286 = por %p284, %p285
    %p287 = scmp.ne.s32.totalorder %s276, %s279
    %p288 = scmp.eq.s32.totalorder %s25, 3
    %p289 = por %p287, %p288
    %p290 = scmp.ne.s32.totalorder %s279, %s280
    %p291 = scmp.eq.s32.totalorder %s25, 0
    %p292 = por %p290, %p291
    %p293 = scmp.ne.s32.totalorder %s279, %s280
    %p294 = scmp.eq.s32.totalorder %s26, 3
    %p295 = por %p293, %p294
    %p297 = scmp.ne.s32.totalorder %s280, %s296
    %p298 = scmp.eq.s32.totalorder %s26, 0
    %p299 = por %p297, %p298
    %s300 = ssub.s32 %s28, %s35
    %p301 = scmp.eq.s32.totalorder %s300, 0
    %s303 = sadd.s32 %s302, 1
    %s304 = scalar_select %p301, %s302, %s303
    %p307 = pneg %p301
    %p308 = scmp.eq.s32.totalorder %s20, 3
    %p309 = por %p307, %p308
    %p310 = scmp.ne.s32.totalorder %s302, %s305
    %p311 = scmp.eq.s32.totalorder %s20, 0
    %p312 = por %p310, %p311
    %p313 = scmp.ne.s32.totalorder %s302, %s305
    %p314 = scmp.eq.s32.totalorder %s25, 3
    %p315 = por %p313, %p314
    %p316 = scmp.ne.s32.totalorder %s305, %s306
    %p317 = scmp.eq.s32.totalorder %s25, 0
    %p318 = por %p316, %p317
    %p319 = scmp.ne.s32.totalorder %s305, %s306
    %p320 = scmp.eq.s32.totalorder %s26, 3
    %p321 = por %p319, %p320
    %p323 = scmp.ne.s32.totalorder %s306, %s322
    %p324 = scmp.eq.s32.totalorder %s26, 0
    %p325 = por %p323, %p324
    %s326 = ssub.s32 %s28, %s35
    %p327 = scmp.eq.s32.totalorder %s326, 0
    %s329 = sadd.s32 %s328, 1
    %s330 = scalar_select %p327, %s328, %s329
    %p333 = pneg %p327
    %p334 = scmp.eq.s32.totalorder %s20, 3
    %p335 = por %p333, %p334
    %p336 = scmp.ne.s32.totalorder %s328, %s331
    %p337 = scmp.eq.s32.totalorder %s20, 0
    %p338 = por %p336, %p337
    %p339 = scmp.ne.s32.totalorder %s328, %s331
    %p340 = scmp.eq.s32.totalorder %s25, 3
    %p341 = por %p339, %p340
    %p342 = scmp.ne.s32.totalorder %s331, %s332
    %p343 = scmp.eq.s32.totalorder %s25, 0
    %p344 = por %p342, %p343
    %p345 = scmp.ne.s32.totalorder %s331, %s332
    %p346 = scmp.eq.s32.totalorder %s26, 3
    %p347 = por %p345, %p346
    %p349 = scmp.ne.s32.totalorder %s332, %s348
    %p350 = scmp.eq.s32.totalorder %s26, 0
    %p351 = por %p349, %p350
    %s352 = ssub.s32 %s28, %s35
    %p353 = scmp.eq.s32.totalorder %s352, 0
    %s355 = sadd.s32 %s354, 1
    %s356 = scalar_select %p353, %s354, %s355
    %p359 = pneg %p353
    %p360 = scmp.eq.s32.totalorder %s20, 3
    %p361 = por %p359, %p360
    %p362 = scmp.ne.s32.totalorder %s354, %s357
    %p363 = scmp.eq.s32.totalorder %s20, 0
    %p364 = por %p362, %p363
    %p365 = scmp.ne.s32.totalorder %s354, %s357
    %p366 = scmp.eq.s32.totalorder %s25, 3
    %p367 = por %p365, %p366
    %p368 = scmp.ne.s32.totalorder %s357, %s358
    %p369 = scmp.eq.s32.totalorder %s25, 0
    %p370 = por %p368, %p369
    %p371 = scmp.ne.s32.totalorder %s357, %s358
    %p372 = scmp.eq.s32.totalorder %s26, 3
    %p373 = por %p371, %p372
    %p375 = scmp.ne.s32.totalorder %s358, %s374
    %p376 = scmp.eq.s32.totalorder %s26, 0
    %p377 = por %p375, %p376
    %s378 = ssub.s32 %s28, %s35
    %p379 = scmp.eq.s32.totalorder %s378, 0
    %s381 = sadd.s32 %s380, 1
    %s382 = scalar_select %p379, %s380, %s381
    %p385 = pneg %p379
    %p386 = scmp.eq.s32.totalorder %s20, 3
    %p387 = por %p385, %p386
    %p388 = scmp.ne.s32.totalorder %s380, %s383
    %p389 = scmp.eq.s32.totalorder %s20, 0
    %p390 = por %p388, %p389
    %p391 = scmp.ne.s32.totalorder %s380, %s383
    %p392 = scmp.eq.s32.totalorder %s25, 3
    %p393 = por %p391, %p392
    %p394 = scmp.ne.s32.totalorder %s383, %s384
    %p395 = scmp.eq.s32.totalorder %s25, 0
    %p396 = por %p394, %p395
    %p397 = scmp.ne.s32.totalorder %s383, %s384
    %p398 = scmp.eq.s32.totalorder %s26, 3
    %p399 = por %p397, %p398
    %p401 = scmp.ne.s32.totalorder %s384, %s400
    %p402 = scmp.eq.s32.totalorder %s26, 0
    %p403 = por %p401, %p402
    %s404 = ssub.s32 %s27, %s39
    %p405 = scmp.eq.s32.totalorder %s404, 0
    %s407 = sadd.s32 %s406, 1
    %s408 = scalar_select %p405, %s406, %s407
    %p411 = pneg %p405
    %p412 = scmp.eq.s32.totalorder %s20, 3
    %p413 = por %p411, %p412
    %p414 = scmp.ne.s32.totalorder %s406, %s409
    %p415 = scmp.eq.s32.totalorder %s20, 0
    %p416 = por %p414, %p415
    %p417 = scmp.ne.s32.totalorder %s406, %s409
    %p418 = scmp.eq.s32.totalorder %s25, 3
    %p419 = por %p417, %p418
    %p420 = scmp.ne.s32.totalorder %s409, %s410
    %p421 = scmp.eq.s32.totalorder %s25, 0
    %p422 = por %p420, %p421
    %p423 = scmp.ne.s32.totalorder %s409, %s410
    %p424 = scmp.eq.s32.totalorder %s26, 3
    %p425 = por %p423, %p424
    %p427 = scmp.ne.s32.totalorder %s410, %s426
    %p428 = scmp.eq.s32.totalorder %s26, 0
    %p429 = por %p427, %p428
    %p430 = scmp.le.s32.totalorder 1, %s20
    %p431 = scmp.lt.s32.totalorder %s20, 5
    %p432 = pnand %p430, %p431
    %p433 = pneg %p432
    // Predicated region
    $region9: #{gpt_forward.2} parent=5 // pred_check
      _
    $region10: #{gpt_forward.2} parent=5 // pred_check_branch
      %435 = sbr.rel (%p432) target = $region12
    $region11: #{gpt_forward.2} parent=5 // pred_region
      %s436 = ssub.s32 %s20, 1
    $region12: #{gpt_forward.2} parent=5 // pred_fallthru
      _
    %p437 = scmp.lt.s32.totalorder %s20, 4
    // Predicated region
    $region13: #{gpt_forward.2} parent=5 // pred_check
      %p438 = pneg %p437
    $region14: #{gpt_forward.2} parent=5 // pred_check_branch
      %440 = sbr.rel (%p438) target = $region16
    $region15: #{gpt_forward.2} parent=5 // pred_region
      // Predicated region
      $region17: #{gpt_forward.2} parent=15 // pred_check
        %p441 = pneg %p52
      $region18: #{gpt_forward.2} parent=15 // pred_check_branch
        %443 = sbr.rel (%p441) target = $region20
      $region19: #{gpt_forward.2} parent=15 // pred_region
        %p444 = scmp.lt.s32.totalorder %s27, 1
        %s445 = scalar_select %p444, %s27, 1
        %s446 = smul.addr %s445, 8
        %s447 = scalar_lea.vmem %s0, %s446
      $region20: #{gpt_forward.2} parent=15 // pred_fallthru
        _
      // Predicated region
      $region21: #{gpt_forward.2} parent=15 // pred_check
        %p448 = pneg %p78
      $region22: #{gpt_forward.2} parent=15 // pred_check_branch
        %450 = sbr.rel (%p448) target = $region24
      $region23: #{gpt_forward.2} parent=15 // pred_region
        %p451 = scmp.lt.s32.totalorder %s28, 1
        %s452 = scalar_select %p451, %s28, 1
        %s453 = scalar_lea.vmem %s1, %s452
      $region24: #{gpt_forward.2} parent=15 // pred_fallthru
        _
      // Predicated region
      $region25: #{gpt_forward.2} parent=15 // pred_check
        %p454 = pneg %p104
      $region26: #{gpt_forward.2} parent=15 // pred_check_branch
        %456 = sbr.rel (%p454) target = $region28
      $region27: #{gpt_forward.2} parent=15 // pred_region
        %p457 = scmp.lt.s32.totalorder %s28, 1
        %s458 = scalar_select %p457, %s28, 1
        %s459 = scalar_lea.vmem %s2, %s458
      $region28: #{gpt_forward.2} parent=15 // pred_fallthru
        _
      // Predicated region
      $region29: #{gpt_forward.2} parent=15 // pred_check
        %p460 = pneg %p130
      $region30: #{gpt_forward.2} parent=15 // pred_check_branch
        %462 = sbr.rel (%p460) target = $region32
      $region31: #{gpt_forward.2} parent=15 // pred_region
        %p463 = scmp.lt.s32.totalorder %s28, 1
        %s464 = scalar_select %p463, %s28, 1
        %s465 = smul.addr %s464, 4
        %s466 = smul.addr %s465, 4
        %s467 = scalar_lea.vmem %s3, %s466
      $region32: #{gpt_forward.2} parent=15 // pred_fallthru
        _
      // Predicated region
      $region33: #{gpt_forward.2} parent=15 // pred_check
        %p468 = pneg %p156
      $region34: #{gpt_forward.2} parent=15 // pred_check_branch
        %470 = sbr.rel (%p468) target = $region36
      $region35: #{gpt_forward.2} parent=15 // pred_region
        %p471 = scmp.lt.s32.totalorder %s28, 1
        %s472 = scalar_select %p471, %s28, 1
        %s473 = smul.addr %s472, 4
        %s474 = smul.addr %s473, 4
        %s475 = scalar_lea.vmem %s4, %s474
      $region36: #{gpt_forward.2} parent=15 // pred_fallthru
        _
      // Predicated region
      $region37: #{gpt_forward.2} parent=15 // pred_check
        %p476 = pneg %p182
      $region38: #{gpt_forward.2} parent=15 // pred_check_branch
        %478 = sbr.rel (%p476) target = $region40
      $region39: #{gpt_forward.2} parent=15 // pred_region
        %p479 = scmp.lt.s32.totalorder %s28, 1
        %s480 = scalar_select %p479, %s28, 1
        %s481 = smul.addr %s480, 4
        %s482 = smul.addr %s481, 4
        %s483 = scalar_lea.vmem %s5, %s482
      $region40: #{gpt_forward.2} parent=15 // pred_fallthru
        _
      // Predicated region
      $region41: #{gpt_forward.2} parent=15 // pred_check
        %p484 = pneg %p208
      $region42: #{gpt_forward.2} parent=15 // pred_check_branch
        %486 = sbr.rel (%p484) target = $region44
      $region43: #{gpt_forward.2} parent=15 // pred_region
        %p487 = scmp.lt.s32.totalorder %s28, 1
        %s488 = scalar_select %p487, %s28, 1
        %s489 = smul.addr %s488, 4
        %s490 = smul.addr %s489, 4
        %s491 = scalar_lea.vmem %s6, %s490
      $region44: #{gpt_forward.2} parent=15 // pred_fallthru
        _
      // Predicated region
      $region45: #{gpt_forward.2} parent=15 // pred_check
        %p492 = pneg %p234
      $region46: #{gpt_forward.2} parent=15 // pred_check_branch
        %494 = sbr.rel (%p492) target = $region48
      $region47: #{gpt_forward.2} parent=15 // pred_region
        %p495 = scmp.lt.s32.totalorder %s28, 1
        %s496 = scalar_select %p495, %s28, 1
        %s497 = scalar_lea.vmem %s7, %s496
      $region48: #{gpt_forward.2} parent=15 // pred_fallthru
        _
      // Predicated region
      $region49: #{gpt_forward.2} parent=15 // pred_check
        %p498 = pneg %p260
      $region50: #{gpt_forward.2} parent=15 // pred_check_branch
        %500 = sbr.rel (%p498) target = $region52
      $region51: #{gpt_forward.2} parent=15 // pred_region
        %p501 = scmp.lt.s32.totalorder %s28, 1
        %s502 = scalar_select %p501, %s28, 1
        %s503 = scalar_lea.vmem %s8, %s502
      $region52: #{gpt_forward.2} parent=15 // pred_fallthru
        _
      // Predicated region
      $region53: #{gpt_forward.2} parent=15 // pred_check
        %p504 = pneg %p286
      $region54: #{gpt_forward.2} parent=15 // pred_check_branch
        %506 = sbr.rel (%p504) target = $region56
      $region55: #{gpt_forward.2} parent=15 // pred_region
        %p507 = scmp.lt.s32.totalorder %s28, 1
        %s508 = scalar_select %p507, %s28, 1
        %s509 = scalar_lea.vmem %s9, %s508
      $region56: #{gpt_forward.2} parent=15 // pred_fallthru
        _
      // Predicated region
      $region57: #{gpt_forward.2} parent=15 // pred_check
        %p510 = pneg %p312
      $region58: #{gpt_forward.2} parent=15 // pred_check_branch
        %512 = sbr.rel (%p510) target = $region60
      $region59: #{gpt_forward.2} parent=15 // pred_region
        %p513 = scmp.lt.s32.totalorder %s28, 1
        %s514 = scalar_select %p513, %s28, 1
        %s515 = smul.addr %s514, 4
        %s516 = smul.addr %s515, 4
        %s517 = scalar_lea.vmem %s10, %s516
      $region60: #{gpt_forward.2} parent=15 // pred_fallthru
        _
      // Predicated region
      $region61: #{gpt_forward.2} parent=15 // pred_check
        %p518 = pneg %p338
      $region62: #{gpt_forward.2} parent=15 // pred_check_branch
        %520 = sbr.rel (%p518) target = $region64
      $region63: #{gpt_forward.2} parent=15 // pred_region
        %p521 = scmp.lt.s32.totalorder %s28, 1
        %s522 = scalar_select %p521, %s28, 1
        %s523 = scalar_lea.vmem %s11, %s522
      $region64: #{gpt_forward.2} parent=15 // pred_fallthru
        _
      // Predicated region
      $region65: #{gpt_forward.2} parent=15 // pred_check
        %p524 = pneg %p364
      $region66: #{gpt_forward.2} parent=15 // pred_check_branch
        %526 = sbr.rel (%p524) target = $region68
      $region67: #{gpt_forward.2} parent=15 // pred_region
        %p527 = scmp.lt.s32.totalorder %s28, 1
        %s528 = scalar_select %p527, %s28, 1
        %s529 = smul.addr %s528, 16
        %s530 = smul.addr %s529, 4
        %s531 = scalar_lea.vmem %s12, %s530
      $region68: #{gpt_forward.2} parent=15 // pred_fallthru
        _
      // Predicated region
      $region69: #{gpt_forward.2} parent=15 // pred_check
        %p532 = pneg %p390
      $region70: #{gpt_forward.2} parent=15 // pred_check_branch
        %534 = sbr.rel (%p532) target = $region72
      $region71: #{gpt_forward.2} parent=15 // pred_region
        %p535 = scmp.lt.s32.totalorder %s28, 1
        %s536 = scalar_select %p535, %s28, 1
        %s537 = scalar_lea.vmem %s13, %s536
      $region72: #{gpt_forward.2} parent=15 // pred_fallthru
        _
    $region16: #{gpt_forward.2} parent=5 // pred_fallthru
      _
    %p538 = scmp.le.s32.totalorder 1, %s20
    %p539 = scmp.lt.s32.totalorder %s20, 5
    %p540 = pnand %p538, %p539
    %p541 = pneg %p540
    // Predicated region
    $region73: #{gpt_forward.2} parent=5 // pred_check
      _
    $region74: #{gpt_forward.2} parent=5 // pred_check_branch
      %543 = sbr.rel (%p540) target = $region76
    $region75: #{gpt_forward.2} parent=5 // pred_region
      %s544 = ssub.s32 %s20, 1
      %p545 = scmp.lt.s32.totalorder %s29, 1
      %s546 = scalar_select %p545, %s29, 1
      %s547 = smul.addr %s546, 8
      %s548 = scalar_lea.vmem %s0, %s547
      %p549 = pneg %p58
      %p550 = pneg %p55
      %p551 = scmp.lt.s32.totalorder %s30, 1
      %s552 = scalar_select %p551, %s30, 1
      %s553 = scalar_lea.vmem %s1, %s552
      %p554 = pneg %p84
      %p555 = pneg %p81
      %p556 = scmp.lt.s32.totalorder %s30, 1
      %s557 = scalar_select %p556, %s30, 1
      %s558 = scalar_lea.vmem %s2, %s557
      %p559 = pneg %p110
      %p560 = pneg %p107
      %p561 = scmp.lt.s32.totalorder %s30, 1
      %s562 = scalar_select %p561, %s30, 1
      %s563 = smul.addr %s562, 4
      %s564 = smul.addr %s563, 4
      %s565 = scalar_lea.vmem %s3, %s564
      %p566 = pneg %p136
      %p567 = pneg %p133
      %p568 = scmp.lt.s32.totalorder %s30, 1
      %s569 = scalar_select %p568, %s30, 1
      %s570 = smul.addr %s569, 4
      %s571 = smul.addr %s570, 4
      %s572 = scalar_lea.vmem %s4, %s571
      %p573 = pneg %p162
      %p574 = pneg %p159
      %p575 = scmp.lt.s32.totalorder %s30, 1
      %s576 = scalar_select %p575, %s30, 1
      %s577 = smul.addr %s576, 4
      %s578 = smul.addr %s577, 4
      %s579 = scalar_lea.vmem %s5, %s578
      %p580 = pneg %p188
      %p581 = pneg %p185
      %p582 = scmp.lt.s32.totalorder %s30, 1
      %s583 = scalar_select %p582, %s30, 1
      %s584 = smul.addr %s583, 4
      %s585 = smul.addr %s584, 4
      %s586 = scalar_lea.vmem %s6, %s585
      %p587 = pneg %p214
      %p588 = pneg %p211
      %p589 = scmp.lt.s32.totalorder %s30, 1
      %s590 = scalar_select %p589, %s30, 1
      %s591 = scalar_lea.vmem %s7, %s590
      %p592 = pneg %p240
      %p593 = pneg %p237
      %p594 = scmp.lt.s32.totalorder %s30, 1
      %s595 = scalar_select %p594, %s30, 1
      %s596 = scalar_lea.vmem %s8, %s595
      %p597 = pneg %p266
      %p598 = pneg %p263
      %p599 = scmp.lt.s32.totalorder %s30, 1
      %s600 = scalar_select %p599, %s30, 1
      %s601 = scalar_lea.vmem %s9, %s600
      %p602 = pneg %p292
      %p603 = pneg %p289
      %p604 = scmp.lt.s32.totalorder %s30, 1
      %s605 = scalar_select %p604, %s30, 1
      %s606 = smul.addr %s605, 4
      %s607 = smul.addr %s606, 4
      %s608 = scalar_lea.vmem %s10, %s607
      %p609 = pneg %p318
      %p610 = pneg %p315
      %p611 = scmp.lt.s32.totalorder %s30, 1
      %s612 = scalar_select %p611, %s30, 1
      %s613 = scalar_lea.vmem %s11, %s612
      %p614 = pneg %p344
      %p615 = pneg %p341
      %p616 = scmp.lt.s32.totalorder %s30, 1
      %s617 = scalar_select %p616, %s30, 1
      %s618 = smul.addr %s617, 16
      %s619 = smul.addr %s618, 4
      %s620 = scalar_lea.vmem %s12, %s619
      %p621 = pneg %p370
      %p622 = pneg %p367
      %p623 = scmp.lt.s32.totalorder %s30, 1
      %s624 = scalar_select %p623, %s30, 1
      %s625 = scalar_lea.vmem %s13, %s624
      %p626 = pneg %p396
      %p627 = pneg %p393
      %p628 = pneg %p422
      %p629 = pneg %p419
      %p630 = scmp.lt.s32.totalorder %s29, 1
      %s631 = scalar_select %p630, %s29, 1
      %s632 = smul.addr %s631, 8
      %s633 = scalar_lea.vmem %s14, %s632
      %p634 = scmp.lt.s32.totalorder %s29, 1
      %s635 = scalar_select %p634, %s29, 1
      %s636 = smul.addr %s635, 8
      %s637 = scalar_lea.vmem %s0, %s636
      %p638 = scmp.lt.s32.totalorder %s30, 1
      %s639 = scalar_select %p638, %s30, 1
      %s640 = scalar_lea.vmem %s1, %s639
      %p641 = scmp.lt.s32.totalorder %s30, 1
      %s642 = scalar_select %p641, %s30, 1
      %s643 = scalar_lea.vmem %s2, %s642
      %p644 = scmp.lt.s32.totalorder %s30, 1
      %s645 = scalar_select %p644, %s30, 1
      %s646 = smul.addr %s645, 4
      %s647 = smul.addr %s646, 4
      %s648 = scalar_lea.vmem %s3, %s647
      %p649 = scmp.lt.s32.totalorder %s30, 1
      %s650 = scalar_select %p649, %s30, 1
      %s651 = smul.addr %s650, 4
      %s652 = smul.addr %s651, 4
      %s653 = scalar_lea.vmem %s4, %s652
      %p654 = scmp.lt.s32.totalorder %s30, 1
      %s655 = scalar_select %p654, %s30, 1
      %s656 = smul.addr %s655, 4
      %s657 = smul.addr %s656, 4
      %s658 = scalar_lea.vmem %s5, %s657
      %p659 = scmp.lt.s32.totalorder %s30, 1
      %s660 = scalar_select %p659, %s30, 1
      %s661 = smul.addr %s660, 4
      %s662 = smul.addr %s661, 4
      %s663 = scalar_lea.vmem %s6, %s662
      %p664 = scmp.lt.s32.totalorder %s30, 1
      %s665 = scalar_select %p664, %s30, 1
      %s666 = scalar_lea.vmem %s7, %s665
      %p667 = scmp.lt.s32.totalorder %s30, 1
      %s668 = scalar_select %p667, %s30, 1
      %s669 = scalar_lea.vmem %s8, %s668
      %p670 = scmp.lt.s32.totalorder %s30, 1
      %s671 = scalar_select %p670, %s30, 1
      %s672 = scalar_lea.vmem %s9, %s671
      %p673 = scmp.lt.s32.totalorder %s30, 1
      %s674 = scalar_select %p673, %s30, 1
      %s675 = smul.addr %s674, 4
      %s676 = smul.addr %s675, 4
      %s677 = scalar_lea.vmem %s10, %s676
      %p678 = scmp.lt.s32.totalorder %s30, 1
      %s679 = scalar_select %p678, %s30, 1
      %s680 = scalar_lea.vmem %s11, %s679
      %p681 = scmp.lt.s32.totalorder %s30, 1
      %s682 = scalar_select %p681, %s30, 1
      %s683 = smul.addr %s682, 16
      %s684 = smul.addr %s683, 4
      %s685 = scalar_lea.vmem %s12, %s684
      %p686 = scmp.lt.s32.totalorder %s30, 1
      %s687 = scalar_select %p686, %s30, 1
      %s688 = scalar_lea.vmem %s13, %s687
      %p689 = scmp.lt.s32.totalorder %s29, 1
      %s690 = scalar_select %p689, %s29, 1
      %s691 = smul.addr %s690, 8
      %s692 = scalar_lea.vmem %s14, %s691
      %p694 = scmp.eq.s32.totalorder %s30, 0
      // Predicated region
      $region77: #{gpt_forward.2} parent=75 // pred_check
        %p695 = pneg %p694
      $region78: #{gpt_forward.2} parent=75 // pred_check_branch
        %697 = sbr.rel (%p695) target = $region80
      $region79: #{gpt_forward.2} parent=75 // pred_region
        %v698 = vld [vmem:[%s637] sm:$0xff]
        %vm699 = vcmask 261120
        %700 = vst.msk [vmem:[%s692] sm:$0xff] %vm699, %v698
      $region80: #{gpt_forward.2} parent=75 // pred_fallthru
        _
      %v701 = vld [vmem:[%s692] sm:$0xff]
      %v702 = vld [vmem:[%s640] sm:$0x1]
      %v703 = vld [vmem:[%s643] sm:$0x1]
      %vm704 = vcmask 261120
      %v705 = vsel %vm704, %v701, 0.0
      %706 = vadd.xlane.f32.xlu0 %v705
      %v707 = vpop.xlane.xlu0 %706
      %v708 = vrcp.pop 32.0
      %v709 = vmul.f32 %v707, %v708
      %v710 = vsub.f32 %v701, %v709
      %v711 = vmul.f32 %v710, %v710
      %v712 = vsel %vm704, %v711, 0.0
      %713 = vadd.xlane.f32.xlu0 %v712
      %v714 = vpop.xlane.xlu0 %713
      %v715 = vmul.f32 %v714, %v708
      %v716 = vadd.f32 %v715, 1e-05
      %v717 = vrsqrt.pop %v716
      %v718 = vmul.f32 %v710, %v717
      %v720 = vlaneseq
      %v721 = vshrl.u32 %v720, 7
      %v722 = vsub.s32 0, %v721
      %v723 = vrot.slane %v702, %v722
      %v725 = vmul.f32 %v723, %v718
      %v727 = vlaneseq
      %v728 = vshrl.u32 %v727, 7
      %v729 = vsub.s32 0, %v728
      %v730 = vrot.slane %v703, %v729
      %v732 = vadd.f32 %v725, %v730
      %v733 = vpack.c.bf16 %v732, %v732
      %v734 = vld [vmem:[%s648] sm:$0xf]
      %v735 = vld [vmem:[%s648 + $0x4] sm:$0xf]
      %v736 = vld [vmem:[%s648 + $0x8] sm:$0xf]
      %v737 = vld [vmem:[%s648 + $0xc] sm:$0xf]
      %v742 = vunpack.c.l.b16 %v734
      %v743 = vunpack.c.l.b16 %v735
      %v744 = vunpack.c.l.b16 %v736
      %v745 = vunpack.c.l.b16 %v737
      %v746 = vpack.c.b16 %v743, %v742
      %v747 = vpack.c.b16 %v745, %v744
      %v751 = vsel %vm704, %v733, 0
      %753 = vmatprep.subr.bf16.mxu0 0
      %754 = vmatpush1.bf16.msra.mxu0 %v746
      %755 = vmatprep.subr.bf16.mxu0 0
      %756 = vmatpush1.bf16.msra.mxu0 %v747
      %757 = vmatprep.subr.bf16.mxu0 0
      %758 = vmatpush1.bf16.msra.mxu0 0
      %759 = vmatprep.subr.bf16.mxu0 0
      %760 = vmatpush1.bf16.msra.mxu0 0
      %761 = vmatprep.subr.bf16.mxu0 0
      %762 = vmatpush1.bf16.msra.mxu0 0
      %763 = vmatprep.subr.bf16.mxu0 0
      %764 = vmatpush1.bf16.msra.mxu0 0
      %765 = vmatprep.subr.bf16.mxu0 0
      %766 = vmatpush1.bf16.msra.mxu0 0
      %767 = vmatprep.subr.bf16.mxu0 0
      %768 = vmatpush1.bf16.msra.mxu0 0
      %769 = vmatprep.subr.bf16.mxu0 0
      %770 = vmatpush1.bf16.msra.mxu0 0
      %771 = vmatprep.subr.bf16.mxu0 0
      %772 = vmatpush1.bf16.msra.mxu0 0
      %773 = vmatprep.subr.bf16.mxu0 0
      %774 = vmatpush1.bf16.msra.mxu0 0
      %775 = vmatprep.subr.bf16.mxu0 0
      %776 = vmatpush1.bf16.msra.mxu0 0
      %777 = vmatprep.subr.bf16.mxu0 0
      %778 = vmatpush1.bf16.msra.mxu0 0
      %779 = vmatprep.subr.bf16.mxu0 0
      %780 = vmatpush1.bf16.msra.mxu0 0
      %781 = vmatprep.subr.bf16.mxu0 0
      %782 = vmatpush1.bf16.msra.mxu0 0
      %783 = vmatprep.subr.bf16.mxu0 0
      %784 = vmatpush1.bf16.msra.mxu0 0
      %785 = vmatprep.mubr.bf16.mxu0 0
      %786 = vmatmul.mubr.bf16.gmra.mrb[0].mxu0 %v751
      %v787 = vpop.f32.mrb[0].mxu0
      %v788 = vadd.f32 0.0, %v787
      %v789 = vpop.f32.mrb[0].mxu0
      %v790 = vpop.f32.mrb[0].mxu0
      %v791 = vpop.f32.mrb[0].mxu0
      %792 = vdwg.mxu0
      %v793 = vld [vmem:[%s653] sm:$0xf]
      %v794 = vld [vmem:[%s653 + $0x4] sm:$0xf]
      %v795 = vld [vmem:[%s653 + $0x8] sm:$0xf]
      %v796 = vld [vmem:[%s653 + $0xc] sm:$0xf]
      %v801 = vunpack.c.l.b16 %v793
      %v802 = vunpack.c.l.b16 %v794
      %v803 = vunpack.c.l.b16 %v795
      %v804 = vunpack.c.l.b16 %v796
      %v805 = vpack.c.b16 %v802, %v801
      %v806 = vpack.c.b16 %v804, %v803
      %809 = vmatprep.subr.bf16.mxu0 0
      %810 = vmatpush1.bf16.msra.mxu0 %v805
      %811 = vmatprep.subr.bf16.mxu0 0
      %812 = vmatpush1.bf16.msra.mxu0 %v806
      %813 = vmatprep.subr.bf16.mxu0 0
      %814 = vmatpush1.bf16.msra.mxu0 0
      %815 = vmatprep.subr.bf16.mxu0 0
      %816 = vmatpush1.bf16.msra.mxu0 0
      %817 = vmatprep.subr.bf16.mxu0 0
      %818 = vmatpush1.bf16.msra.mxu0 0
      %819 = vmatprep.subr.bf16.mxu0 0
      %820 = vmatpush1.bf16.msra.mxu0 0
      %821 = vmatprep.subr.bf16.mxu0 0
      %822 = vmatpush1.bf16.msra.mxu0 0
      %823 = vmatprep.subr.bf16.mxu0 0
      %824 = vmatpush1.bf16.msra.mxu0 0
      %825 = vmatprep.subr.bf16.mxu0 0
      %826 = vmatpush1.bf16.msra.mxu0 0
      %827 = vmatprep.subr.bf16.mxu0 0
      %828 = vmatpush1.bf16.msra.mxu0 0
      %829 = vmatprep.subr.bf16.mxu0 0
      %830 = vmatpush1.bf16.msra.mxu0 0
      %831 = vmatprep.subr.bf16.mxu0 0
      %832 = vmatpush1.bf16.msra.mxu0 0
      %833 = vmatprep.subr.bf16.mxu0 0
      %834 = vmatpush1.bf16.msra.mxu0 0
      %835 = vmatprep.subr.bf16.mxu0 0
      %836 = vmatpush1.bf16.msra.mxu0 0
      %837 = vmatprep.subr.bf16.mxu0 0
      %838 = vmatpush1.bf16.msra.mxu0 0
      %839 = vmatprep.subr.bf16.mxu0 0
      %840 = vmatpush1.bf16.msra.mxu0 0
      %841 = vmatprep.mubr.bf16.mxu0 0
      %842 = vmatmul.mubr.bf16.gmra.mrb[0].mxu0 %v751
      %v843 = vpop.f32.mrb[0].mxu0
      %v844 = vadd.f32 0.0, %v843
      %v845 = vpop.f32.mrb[0].mxu0
      %v846 = vpop.f32.mrb[0].mxu0
      %v847 = vpop.f32.mrb[0].mxu0
      %848 = vdwg.mxu0
      %v849 = vld [vmem:[%s658] sm:$0xf]
      %v850 = vld [vmem:[%s658 + $0x4] sm:$0xf]
      %v851 = vld [vmem:[%s658 + $0x8] sm:$0xf]
      %v852 = vld [vmem:[%s658 + $0xc] sm:$0xf]
      %v857 = vunpack.c.l.b16 %v849
      %v858 = vunpack.c.l.b16 %v850
      %v859 = vunpack.c.l.b16 %v851
      %v860 = vunpack.c.l.b16 %v852
      %v861 = vpack.c.b16 %v858, %v857
      %v862 = vpack.c.b16 %v860, %v859
      %865 = vmatprep.subr.bf16.mxu0 0
      %866 = vmatpush1.bf16.msra.mxu0 %v861
      %867 = vmatprep.subr.bf16.mxu0 0
      %868 = vmatpush1.bf16.msra.mxu0 %v862
      %869 = vmatprep.subr.bf16.mxu0 0
      %870 = vmatpush1.bf16.msra.mxu0 0
      %871 = vmatprep.subr.bf16.mxu0 0
      %872 = vmatpush1.bf16.msra.mxu0 0
      %873 = vmatprep.subr.bf16.mxu0 0
      %874 = vmatpush1.bf16.msra.mxu0 0
      %875 = vmatprep.subr.bf16.mxu0 0
      %876 = vmatpush1.bf16.msra.mxu0 0
      %877 = vmatprep.subr.bf16.mxu0 0
      %878 = vmatpush1.bf16.msra.mxu0 0
      %879 = vmatprep.subr.bf16.mxu0 0
      %880 = vmatpush1.bf16.msra.mxu0 0
      %881 = vmatprep.subr.bf16.mxu0 0
      %882 = vmatpush1.bf16.msra.mxu0 0
      %883 = vmatprep.subr.bf16.mxu0 0
      %884 = vmatpush1.bf16.msra.mxu0 0
      %885 = vmatprep.subr.bf16.mxu0 0
      %886 = vmatpush1.bf16.msra.mxu0 0
      %887 = vmatprep.subr.bf16.mxu0 0
      %888 = vmatpush1.bf16.msra.mxu0 0
      %889 = vmatprep.subr.bf16.mxu0 0
      %890 = vmatpush1.bf16.msra.mxu0 0
      %891 = vmatprep.subr.bf16.mxu0 0
      %892 = vmatpush1.bf16.msra.mxu0 0
      %893 = vmatprep.subr.bf16.mxu0 0
      %894 = vmatpush1.bf16.msra.mxu0 0
      %895 = vmatprep.subr.bf16.mxu0 0
      %896 = vmatpush1.bf16.msra.mxu0 0
      %897 = vmatprep.mubr.bf16.mxu0 0
      %898 = vmatmul.mubr.bf16.gmra.mrb[0].mxu0 %v751
      %v899 = vpop.f32.mrb[0].mxu0
      %v900 = vadd.f32 0.0, %v899
      %v901 = vpop.f32.mrb[0].mxu0
      %v902 = vpop.f32.mrb[0].mxu0
      %v903 = vpop.f32.mrb[0].mxu0
      %904 = vdwg.mxu0
      %v905 = vpack.c.bf16 %v788, %v788
      %v906 = vpack.c.bf16 %v844, %v844
      %v907 = vpack.c.bf16 %v900, %v900
      %v908 = vlaneseq
      %v909 = vshrl.u32 %v908, 7
      %v910 = vlaneseq
      %v911 = vand.u32 %v910, 127
      %vm912 = vcmp.gt.s32.totalorder %v911, %v909
      %v913 = vsel %vm912, -1e+30, 0.0
      %vm914 = vcmask 64512
      %v916 = vsel %vm914, %v905, 0
      %v919 = vsel %vm914, %v906, 0
      %921 = vmatprep.subr.bf16.mxu0 0
      %922 = vmatpush1.bf16.xpose.msra.mxu0 %v919
      %923 = vmatprep.subr.bf16.mxu0 0
      %924 = vmatpush1.bf16.xpose.msra.mxu0 0
      %925 = vmatprep.subr.bf16.mxu0 0
      %926 = vmatpush1.bf16.xpose.msra.mxu0 0
      %927 = vmatprep.subr.bf16.mxu0 0
      %928 = vmatpush1.bf16.xpose.msra.mxu0 0
      %929 = vmatprep.subr.bf16.mxu0 0
      %930 = vmatpush1.bf16.xpose.msra.mxu0 0
      %931 = vmatprep.subr.bf16.mxu0 0
      %932 = vmatpush1.bf16.xpose.msra.mxu0 0
      %933 = vmatprep.subr.bf16.mxu0 0
      %934 = vmatpush1.bf16.xpose.msra.mxu0 0
      %935 = vmatprep.subr.bf16.mxu0 0
      %936 = vmatpush1.bf16.xpose.msra.mxu0 0
      %937 = vmatprep.subr.bf16.mxu0 0
      %938 = vmatpush1.bf16.xpose.msra.mxu0 0
      %939 = vmatprep.subr.bf16.mxu0 0
      %940 = vmatpush1.bf16.xpose.msra.mxu0 0
      %941 = vmatprep.subr.bf16.mxu0 0
      %942 = vmatpush1.bf16.xpose.msra.mxu0 0
      %943 = vmatprep.subr.bf16.mxu0 0
      %944 = vmatpush1.bf16.xpose.msra.mxu0 0
      %945 = vmatprep.subr.bf16.mxu0 0
      %946 = vmatpush1.bf16.xpose.msra.mxu0 0
      %947 = vmatprep.subr.bf16.mxu0 0
      %948 = vmatpush1.bf16.xpose.msra.mxu0 0
      %949 = vmatprep.subr.bf16.mxu0 0
      %950 = vmatpush1.bf16.xpose.msra.mxu0 0
      %951 = vmatprep.subr.bf16.mxu0 0
      %952 = vmatpush1.bf16.xpose.msra.mxu0 0
      %953 = vmatprep.mubr.bf16.mxu0 0
      %954 = vmatmul.mubr.bf16.gmra.mrb[0].mxu0 %v916
      %v955 = vpop.f32.mrb[0].mxu0
      %v956 = vadd.f32 %v913, %v955
      %v957 = vpop.f32.mrb[0].mxu0
      %v958 = vpop.f32.mrb[0].mxu0
      %v959 = vpop.f32.mrb[0].mxu0
      %960 = vdwg.mxu0
      %v961 = vsel %vm914, %v956, -inf
      %962 = vmax.xlane.f32.xlu0 %v961
      %v963 = vpop.xlane.xlu0 %962
      %v964 = vsub.f32 %v956, %v963
      %v965 = vmul.f32 %v964, 1.442695
      %v966 = vpow.pop %v965
      %v967 = vsel %vm914, %v966, 0.0
      %968 = vadd.xlane.f32.xlu0 %v967
      %v969 = vpop.xlane.xlu0 %968
      %v970 = vrcp.pop %v969
      %v971 = vmul.f32 %v966, %v970
      %v972 = vpack.c.bf16 %v971, %v971
      %v974 = vsel %vm914, %v972, 0
      %vm976 = vcmask 1043456
      %v978 = vsel %vm976, %v907, 0
      %980 = vmatprep.subr.bf16.mxu0 0
      %981 = vmatpush1.bf16.msra.mxu0 %v978
      %982 = vmatprep.subr.bf16.mxu0 0
      %983 = vmatpush1.bf16.msra.mxu0 0
      %984 = vmatprep.subr.bf16.mxu0 0
      %985 = vmatpush1.bf16.msra.mxu0 0
      %986 = vmatprep.subr.bf16.mxu0 0
      %987 = vmatpush1.bf16.msra.mxu0 0
      %988 = vmatprep.subr.bf16.mxu0 0
      %989 = vmatpush1.bf16.msra.mxu0 0
      %990 = vmatprep.subr.bf16.mxu0 0
      %991 = vmatpush1.bf16.msra.mxu0 0
      %992 = vmatprep.subr.bf16.mxu0 0
      %993 = vmatpush1.bf16.msra.mxu0 0
      %994 = vmatprep.subr.bf16.mxu0 0
      %995 = vmatpush1.bf16.msra.mxu0 0
      %996 = vmatprep.subr.bf16.mxu0 0
      %997 = vmatpush1.bf16.msra.mxu0 0
      %998 = vmatprep.subr.bf16.mxu0 0
      %999 = vmatpush1.bf16.msra.mxu0 0
      %1000 = vmatprep.subr.bf16.mxu0 0
      %1001 = vmatpush1.bf16.msra.mxu0 0
      %1002 = vmatprep.subr.bf16.mxu0 0
      %1003 = vmatpush1.bf16.msra.mxu0 0
      %1004 = vmatprep.subr.bf16.mxu0 0
      %1005 = vmatpush1.bf16.msra.mxu0 0
      %1006 = vmatprep.subr.bf16.mxu0 0
      %1007 = vmatpush1.bf16.msra.mxu0 0
      %1008 = vmatprep.subr.bf16.mxu0 0
      %1009 = vmatpush1.bf16.msra.mxu0 0
      %1010 = vmatprep.subr.bf16.mxu0 0
      %1011 = vmatpush1.bf16.msra.mxu0 0
      %1012 = vmatprep.mubr.bf16.mxu0 0
      %1013 = vmatmul.mubr.bf16.gmra.mrb[0].mxu0 %v974
      %v1014 = vpop.f32.mrb[0].mxu0
      %v1015 = vadd.f32 0.0, %v1014
      %v1016 = vpop.f32.mrb[0].mxu0
      %v1017 = vpop.f32.mrb[0].mxu0
      %v1018 = vpop.f32.mrb[0].mxu0
      %1019 = vdwg.mxu0
      %1021 = vrot.lane.b32.xlu0 %v905, 120
      %v1022 = vpop.permute.xlu0 %1021
      %1024 = vrot.lane.b32.xlu0 %v906, 120
      %v1025 = vpop.permute.xlu0 %1024
      %v1027 = vsel %vm914, %v1022, 0
      %v1030 = vsel %vm914, %v1025, 0
      %1032 = vmatprep.subr.bf16.mxu0 0
      %1033 = vmatpush1.bf16.xpose.msra.mxu0 %v1030
      %1034 = vmatprep.subr.bf16.mxu0 0
      %1035 = vmatpush1.bf16.xpose.msra.mxu0 0
      %1036 = vmatprep.subr.bf16.mxu0 0
      %1037 = vmatpush1.bf16.xpose.msra.mxu0 0
      %1038 = vmatprep.subr.bf16.mxu0 0
      %1039 = vmatpush1.bf16.xpose.msra.mxu0 0
      %1040 = vmatprep.subr.bf16.mxu0 0
      %1041 = vmatpush1.bf16.xpose.msra.mxu0 0
      %1042 = vmatprep.subr.bf16.mxu0 0
      %1043 = vmatpush1.bf16.xpose.msra.mxu0 0
      %1044 = vmatprep.subr.bf16.mxu0 0
      %1045 = vmatpush1.bf16.xpose.msra.mxu0 0
      %1046 = vmatprep.subr.bf16.mxu0 0
      %1047 = vmatpush1.bf16.xpose.msra.mxu0 0
      %1048 = vmatprep.subr.bf16.mxu0 0
      %1049 = vmatpush1.bf16.xpose.msra.mxu0 0
      %1050 = vmatprep.subr.bf16.mxu0 0
      %1051 = vmatpush1.bf16.xpose.msra.mxu0 0
      %1052 = vmatprep.subr.bf16.mxu0 0
      %1053 = vmatpush1.bf16.xpose.msra.mxu0 0
      %1054 = vmatprep.subr.bf16.mxu0 0
      %1055 = vmatpush1.bf16.xpose.msra.mxu0 0
      %1056 = vmatprep.subr.bf16.mxu0 0
      %1057 = vmatpush1.bf16.xpose.msra.mxu0 0
      %1058 = vmatprep.subr.bf16.mxu0 0
      %1059 = vmatpush1.bf16.xpose.msra.mxu0 0
      %1060 = vmatprep.subr.bf16.mxu0 0
      %1061 = vmatpush1.bf16.xpose.msra.mxu0 0
      %1062 = vmatprep.subr.bf16.mxu0 0
      %1063 = vmatpush1.bf16.xpose.msra.mxu0 0
      %1064 = vmatprep.mubr.bf16.mxu0 0
      %1065 = vmatmul.mubr.bf16.gmra.mrb[0].mxu0 %v1027
      %v1066 = vpop.f32.mrb[0].mxu0
      %v1067 = vadd.f32 %v913, %v1066
      %v1068 = vpop.f32.mrb[0].mxu0
      %v1069 = vpop.f32.mrb[0].mxu0
      %v1070 = vpop.f32.mrb[0].mxu0
      %1071 = vdwg.mxu0
      %v1072 = vsel %vm914, %v1067, -inf
      %1073 = vmax.xlane.f32.xlu0 %v1072
      %v1074 = vpop.xlane.xlu0 %1073
      %v1075 = vsub.f32 %v1067, %v1074
      %v1076 = vmul.f32 %v1075, 1.442695
      %v1077 = vpow.pop %v1076
      %v1078 = vsel %vm914, %v1077, 0.0
      %1079 = vadd.xlane.f32.xlu0 %v1078
      %v1080 = vpop.xlane.xlu0 %1079
      %v1081 = vrcp.pop %v1080
      %v1082 = vmul.f32 %v1077, %v1081
      %v1083 = vpack.c.bf16 %v1082, %v1082
      %1085 = vrot.lane.b32.xlu0 %v907, 120
      %v1086 = vpop.permute.xlu0 %1085
      %v1088 = vsel %vm914, %v1083, 0
      %v1091 = vsel %vm976, %v1086, 0
      %1093 = vmatprep.subr.bf16.mxu0 0
      %1094 = vmatpush1.bf16.msra.mxu0 %v1091
      %1095 = vmatprep.subr.bf16.mxu0 0
      %1096 = vmatpush1.bf16.msra.mxu0 0
      %1097 = vmatprep.subr.bf16.mxu0 0
      %1098 = vmatpush1.bf16.msra.mxu0 0
      %1099 = vmatprep.subr.bf16.mxu0 0
      %1100 = vmatpush1.bf16.msra.mxu0 0
      %1101 = vmatprep.subr.bf16.mxu0 0
      %1102 = vmatpush1.bf16.msra.mxu0 0
      %1103 = vmatprep.subr.bf16.mxu0 0
      %1104 = vmatpush1.bf16.msra.mxu0 0
      %1105 = vmatprep.subr.bf16.mxu0 0
      %1106 = vmatpush1.bf16.msra.mxu0 0
      %1107 = vmatprep.subr.bf16.mxu0 0
      %1108 = vmatpush1.bf16.msra.mxu0 0
      %1109 = vmatprep.subr.bf16.mxu0 0
      %1110 = vmatpush1.bf16.msra.mxu0 0
      %1111 = vmatprep.subr.bf16.mxu0 0
      %1112 = vmatpush1.bf16.msra.mxu0 0
      %1113 = vmatprep.subr.bf16.mxu0 0
      %1114 = vmatpush1.bf16.msra.mxu0 0
      %1115 = vmatprep.subr.bf16.mxu0 0
      %1116 = vmatpush1.bf16.msra.mxu0 0
      %1117 = vmatprep.subr.bf16.mxu0 0
      %1118 = vmatpush1.bf16.msra.mxu0 0
      %1119 = vmatprep.subr.bf16.mxu0 0
      %1120 = vmatpush1.bf16.msra.mxu0 0
      %1121 = vmatprep.subr.bf16.mxu0 0
      %1122 = vmatpush1.bf16.msra.mxu0 0
      %1123 = vmatprep.subr.bf16.mxu0 0
      %1124 = vmatpush1.bf16.msra.mxu0 0
      %1125 = vmatprep.mubr.bf16.mxu0 0
      %1126 = vmatmul.mubr.bf16.gmra.mrb[0].mxu0 %v1088
      %v1127 = vpop.f32.mrb[0].mxu0
      %v1128 = vadd.f32 0.0, %v1127
      %v1129 = vpop.f32.mrb[0].mxu0
      %v1130 = vpop.f32.mrb[0].mxu0
      %v1131 = vpop.f32.mrb[0].mxu0
      %1132 = vdwg.mxu0
      %1133 = vrot.lane.b32.xlu0 %v905, 112
      %v1134 = vpop.permute.xlu0 %1133
      %1135 = vrot.lane.b32.xlu0 %v906, 112
      %v1136 = vpop.permute.xlu0 %1135
      %v1138 = vsel %vm914, %v1134, 0
      %v1141 = vsel %vm914, %v1136, 0
      %1143 = vmatprep.subr.bf16.mxu0 0
      %1144 = vmatpush1.bf16.xpose.msra.mxu0 %v1141
      %1145 = vmatprep.subr.bf16.mxu0 0
      %1146 = vmatpush1.bf16.xpose.msra.mxu0 0
      %1147 = vmatprep.subr.bf16.mxu0 0
      %1148 = vmatpush1.bf16.xpose.msra.mxu0 0
      %1149 = vmatprep.subr.bf16.mxu0 0
      %1150 = vmatpush1.bf16.xpose.msra.mxu0 0
      %1151 = vmatprep.subr.bf16.mxu0 0
      %1152 = vmatpush1.bf16.xpose.msra.mxu0 0
      %1153 = vmatprep.subr.bf16.mxu0 0
      %1154 = vmatpush1.bf16.xpose.msra.mxu0 0
      %1155 = vmatprep.subr.bf16.mxu0 0
      %1156 = vmatpush1.bf16.xpose.msra.mxu0 0
      %1157 = vmatprep.subr.bf16.mxu0 0
      %1158 = vmatpush1.bf16.xpose.msra.mxu0 0
      %1159 = vmatprep.subr.bf16.mxu0 0
      %1160 = vmatpush1.bf16.xpose.msra.mxu0 0
      %1161 = vmatprep.subr.bf16.mxu0 0
      %1162 = vmatpush1.bf16.xpose.msra.mxu0 0
      %1163 = vmatprep.subr.bf16.mxu0 0
      %1164 = vmatpush1.bf16.xpose.msra.mxu0 0
      %1165 = vmatprep.subr.bf16.mxu0 0
      %1166 = vmatpush1.bf16.xpose.msra.mxu0 0
      %1167 = vmatprep.subr.bf16.mxu0 0
      %1168 = vmatpush1.bf16.xpose.msra.mxu0 0
      %1169 = vmatprep.subr.bf16.mxu0 0
      %1170 = vmatpush1.bf16.xpose.msra.mxu0 0
      %1171 = vmatprep.subr.bf16.mxu0 0
      %1172 = vmatpush1.bf16.xpose.msra.mxu0 0
      %1173 = vmatprep.subr.bf16.mxu0 0
      %1174 = vmatpush1.bf16.xpose.msra.mxu0 0
      %1175 = vmatprep.mubr.bf16.mxu0 0
      %1176 = vmatmul.mubr.bf16.gmra.mrb[0].mxu0 %v1138
      %v1177 = vpop.f32.mrb[0].mxu0
      %v1178 = vadd.f32 %v913, %v1177
      %v1179 = vpop.f32.mrb[0].mxu0
      %v1180 = vpop.f32.mrb[0].mxu0
      %v1181 = vpop.f32.mrb[0].mxu0
      %1182 = vdwg.mxu0
      %v1183 = vsel %vm914, %v1178, -inf
      %1184 = vmax.xlane.f32.xlu0 %v1183
      %v1185 = vpop.xlane.xlu0 %1184
      %v1186 = vsub.f32 %v1178, %v1185
      %v1187 = vmul.f32 %v1186, 1.442695
      %v1188 = vpow.pop %v1187
      %v1189 = vsel %vm914, %v1188, 0.0
      %1190 = vadd.xlane.f32.xlu0 %v1189
      %v1191 = vpop.xlane.xlu0 %1190
      %v1192 = vrcp.pop %v1191
      %v1193 = vmul.f32 %v1188, %v1192
      %v1194 = vpack.c.bf16 %v1193, %v1193
      %1195 = vrot.lane.b32.xlu0 %v907, 112
      %v1196 = vpop.permute.xlu0 %1195
      %v1198 = vsel %vm914, %v1194, 0
      %v1201 = vsel %vm976, %v1196, 0
      %1203 = vmatprep.subr.bf16.mxu0 0
      %1204 = vmatpush1.bf16.msra.mxu0 %v1201
      %1205 = vmatprep.subr.bf16.mxu0 0
      %1206 = vmatpush1.bf16.msra.mxu0 0
      %1207 = vmatprep.subr.bf16.mxu0 0
      %1208 = vmatpush1.bf16.msra.mxu0 0
      %1209 = vmatprep.subr.bf16.mxu0 0
      %1210 = vmatpush1.bf16.msra.mxu0 0
      %1211 = vmatprep.subr.bf16.mxu0 0
      %1212 = vmatpush1.bf16.msra.mxu0 0
      %1213 = vmatprep.subr.bf16.mxu0 0
      %1214 = vmatpush1.bf16.msra.mxu0 0
      %1215 = vmatprep.subr.bf16.mxu0 0
      %1216 = vmatpush1.bf16.msra.mxu0 0
      %1217 = vmatprep.subr.bf16.mxu0 0
      %1218 = vmatpush1.bf16.msra.mxu0 0
      %1219 = vmatprep.subr.bf16.mxu0 0
      %1220 = vmatpush1.bf16.msra.mxu0 0
      %1221 = vmatprep.subr.bf16.mxu0 0
      %1222 = vmatpush1.bf16.msra.mxu0 0
      %1223 = vmatprep.subr.bf16.mxu0 0
      %1224 = vmatpush1.bf16.msra.mxu0 0
      %1225 = vmatprep.subr.bf16.mxu0 0
      %1226 = vmatpush1.bf16.msra.mxu0 0
      %1227 = vmatprep.subr.bf16.mxu0 0
      %1228 = vmatpush1.bf16.msra.mxu0 0
      %1229 = vmatprep.subr.bf16.mxu0 0
      %1230 = vmatpush1.bf16.msra.mxu0 0
      %1231 = vmatprep.subr.bf16.mxu0 0
      %1232 = vmatpush1.bf16.msra.mxu0 0
      %1233 = vmatprep.subr.bf16.mxu0 0
      %1234 = vmatpush1.bf16.msra.mxu0 0
      %1235 = vmatprep.mubr.bf16.mxu0 0
      %1236 = vmatmul.mubr.bf16.gmra.mrb[0].mxu0 %v1198
      %v1237 = vpop.f32.mrb[0].mxu0
      %v1238 = vadd.f32 0.0, %v1237
      %v1239 = vpop.f32.mrb[0].mxu0
      %v1240 = vpop.f32.mrb[0].mxu0
      %v1241 = vpop.f32.mrb[0].mxu0
      %1242 = vdwg.mxu0
      %1243 = vrot.lane.b32.xlu0 %v905, 104
      %v1244 = vpop.permute.xlu0 %1243
      %1245 = vrot.lane.b32.xlu0 %v906, 104
      %v1246 = vpop.permute.xlu0 %1245
      %v1248 = vsel %vm914, %v1244, 0
      %v1251 = vsel %vm914, %v1246, 0
      %1253 = vmatprep.subr.bf16.mxu0 0
      %1254 = vmatpush1.bf16.xpose.msra.mxu0 %v1251
      %1255 = vmatprep.subr.bf16.mxu0 0
      %1256 = vmatpush1.bf16.xpose.msra.mxu0 0
      %1257 = vmatprep.subr.bf16.mxu0 0
      %1258 = vmatpush1.bf16.xpose.msra.mxu0 0
      %1259 = vmatprep.subr.bf16.mxu0 0
      %1260 = vmatpush1.bf16.xpose.msra.mxu0 0
      %1261 = vmatprep.subr.bf16.mxu0 0
      %1262 = vmatpush1.bf16.xpose.msra.mxu0 0
      %1263 = vmatprep.subr.bf16.mxu0 0
      %1264 = vmatpush1.bf16.xpose.msra.mxu0 0
      %1265 = vmatprep.subr.bf16.mxu0 0
      %1266 = vmatpush1.bf16.xpose.msra.mxu0 0
      %1267 = vmatprep.subr.bf16.mxu0 0
      %1268 = vmatpush1.bf16.xpose.msra.mxu0 0
      %1269 = vmatprep.subr.bf16.mxu0 0
      %1270 = vmatpush1.bf16.xpose.msra.mxu0 0
      %1271 = vmatprep.subr.bf16.mxu0 0
      %1272 = vmatpush1.bf16.xpose.msra.mxu0 0
      %1273 = vmatprep.subr.bf16.mxu0 0
      %1274 = vmatpush1.bf16.xpose.msra.mxu0 0
      %1275 = vmatprep.subr.bf16.mxu0 0
      %1276 = vmatpush1.bf16.xpose.msra.mxu0 0
      %1277 = vmatprep.subr.bf16.mxu0 0
      %1278 = vmatpush1.bf16.xpose.msra.mxu0 0
      %1279 = vmatprep.subr.bf16.mxu0 0
      %1280 = vmatpush1.bf16.xpose.msra.mxu0 0
      %1281 = vmatprep.subr.bf16.mxu0 0
      %1282 = vmatpush1.bf16.xpose.msra.mxu0 0
      %1283 = vmatprep.subr.bf16.mxu0 0
      %1284 = vmatpush1.bf16.xpose.msra.mxu0 0
      %1285 = vmatprep.mubr.bf16.mxu0 0
      %1286 = vmatmul.mubr.bf16.gmra.mrb[0].mxu0 %v1248
      %v1287 = vpop.f32.mrb[0].mxu0
      %v1288 = vadd.f32 %v913, %v1287
      %v1289 = vpop.f32.mrb[0].mxu0
      %v1290 = vpop.f32.mrb[0].mxu0
      %v1291 = vpop.f32.mrb[0].mxu0
      %1292 = vdwg.mxu0
      %v1293 = vsel %vm914, %v1288, -inf
      %1294 = vmax.xlane.f32.xlu0 %v1293
      %v1295 = vpop.xlane.xlu0 %1294
      %v1296 = vsub.f32 %v1288, %v1295
      %v1297 = vmul.f32 %v1296, 1.442695
      %v1298 = vpow.pop %v1297
      %v1299 = vsel %vm914, %v1298, 0.0
      %1300 = vadd.xlane.f32.xlu0 %v1299
      %v1301 = vpop.xlane.xlu0 %1300
      %v1302 = vrcp.pop %v1301
      %v1303 = vmul.f32 %v1298, %v1302
      %v1304 = vpack.c.bf16 %v1303, %v1303
      %1305 = vrot.lane.b32.xlu0 %v907, 104
      %v1306 = vpop.permute.xlu0 %1305
      %v1308 = vsel %vm914, %v1304, 0
      %v1311 = vsel %vm976, %v1306, 0
      %1313 = vmatprep.subr.bf16.mxu0 0
      %1314 = vmatpush1.bf16.msra.mxu0 %v1311
      %1315 = vmatprep.subr.bf16.mxu0 0
      %1316 = vmatpush1.bf16.msra.mxu0 0
      %1317 = vmatprep.subr.bf16.mxu0 0
      %1318 = vmatpush1.bf16.msra.mxu0 0
      %1319 = vmatprep.subr.bf16.mxu0 0
      %1320 = vmatpush1.bf16.msra.mxu0 0
      %1321 = vmatprep.subr.bf16.mxu0 0
      %1322 = vmatpush1.bf16.msra.mxu0 0
      %1323 = vmatprep.subr.bf16.mxu0 0
      %1324 = vmatpush1.bf16.msra.mxu0 0
      %1325 = vmatprep.subr.bf16.mxu0 0
      %1326 = vmatpush1.bf16.msra.mxu0 0
      %1327 = vmatprep.subr.bf16.mxu0 0
      %1328 = vmatpush1.bf16.msra.mxu0 0
      %1329 = vmatprep.subr.bf16.mxu0 0
      %1330 = vmatpush1.bf16.msra.mxu0 0
      %1331 = vmatprep.subr.bf16.mxu0 0
      %1332 = vmatpush1.bf16.msra.mxu0 0
      %1333 = vmatprep.subr.bf16.mxu0 0
      %1334 = vmatpush1.bf16.msra.mxu0 0
      %1335 = vmatprep.subr.bf16.mxu0 0
      %1336 = vmatpush1.bf16.msra.mxu0 0
      %1337 = vmatprep.subr.bf16.mxu0 0
      %1338 = vmatpush1.bf16.msra.mxu0 0
      %1339 = vmatprep.subr.bf16.mxu0 0
      %1340 = vmatpush1.bf16.msra.mxu0 0
      %1341 = vmatprep.subr.bf16.mxu0 0
      %1342 = vmatpush1.bf16.msra.mxu0 0
      %1343 = vmatprep.subr.bf16.mxu0 0
      %1344 = vmatpush1.bf16.msra.mxu0 0
      %1345 = vmatprep.mubr.bf16.mxu0 0
      %1346 = vmatmul.mubr.bf16.gmra.mrb[0].mxu0 %v1308
      %v1347 = vpop.f32.mrb[0].mxu0
      %v1348 = vadd.f32 0.0, %v1347
      %v1349 = vpop.f32.mrb[0].mxu0
      %v1350 = vpop.f32.mrb[0].mxu0
      %v1351 = vpop.f32.mrb[0].mxu0
      %1352 = vdwg.mxu0
      %1354 = vrot.lane.b32.xlu0 %v1128, 8
      %v1355 = vpop.permute.xlu0 %1354
      %1358 = vrot.lane.b32.xlu0 %v1238, 16
      %v1359 = vpop.permute.xlu0 %1358
      %1362 = vrot.lane.b32.xlu0 %v1348, 24
      %v1363 = vpop.permute.xlu0 %1362
      %v1365 = vsel %vm914, %v1015, %v1355
      %vm1366 = vcmask 130048
      %v1367 = vsel %vm1366, %v1365, %v1359
      %vm1368 = vcmask 195584
      %v1369 = vsel %vm1368, %v1367, %v1363
      %v1370 = vpack.c.bf16 %v1369, %v1369
      %v1371 = vld [vmem:[%s663] sm:$0xf]
      %v1372 = vld [vmem:[%s663 + $0x4] sm:$0xf]
      %v1373 = vld [vmem:[%s663 + $0x8] sm:$0xf]
      %v1374 = vld [vmem:[%s663 + $0xc] sm:$0xf]
      %v1375 = vld [vmem:[%s666] sm:$0x1]
      %v1377 = vlaneseq
      %v1378 = vshrl.u32 %v1377, 7
      %v1379 = vsub.s32 0, %v1378
      %v1380 = vrot.slane %v1375, %v1379
      %v1386 = vunpack.c.l.b16 %v1371
      %v1387 = vunpack.c.l.b16 %v1372
      %v1388 = vunpack.c.l.b16 %v1373
      %v1389 = vunpack.c.l.b16 %v1374
      %v1390 = vpack.c.b16 %v1387, %v1386
      %v1391 = vpack.c.b16 %v1389, %v1388
      %v1395 = vsel %vm704, %v1370, 0
      %1397 = vmatprep.subr.bf16.mxu0 0
      %1398 = vmatpush1.bf16.msra.mxu0 %v1390
      %1399 = vmatprep.subr.bf16.mxu0 0
      %1400 = vmatpush1.bf16.msra.mxu0 %v1391
      %1401 = vmatprep.subr.bf16.mxu0 0
      %1402 = vmatpush1.bf16.msra.mxu0 0
      %1403 = vmatprep.subr.bf16.mxu0 0
      %1404 = vmatpush1.bf16.msra.mxu0 0
      %1405 = vmatprep.subr.bf16.mxu0 0
      %1406 = vmatpush1.bf16.msra.mxu0 0
      %1407 = vmatprep.subr.bf16.mxu0 0
      %1408 = vmatpush1.bf16.msra.mxu0 0
      %1409 = vmatprep.subr.bf16.mxu0 0
      %1410 = vmatpush1.bf16.msra.mxu0 0
      %1411 = vmatprep.subr.bf16.mxu0 0
      %1412 = vmatpush1.bf16.msra.mxu0 0
      %1413 = vmatprep.subr.bf16.mxu0 0
      %1414 = vmatpush1.bf16.msra.mxu0 0
      %1415 = vmatprep.subr.bf16.mxu0 0
      %1416 = vmatpush1.bf16.msra.mxu0 0
      %1417 = vmatprep.subr.bf16.mxu0 0
      %1418 = vmatpush1.bf16.msra.mxu0 0
      %1419 = vmatprep.subr.bf16.mxu0 0
      %1420 = vmatpush1.bf16.msra.mxu0 0
      %1421 = vmatprep.subr.bf16.mxu0 0
      %1422 = vmatpush1.bf16.msra.mxu0 0
      %1423 = vmatprep.subr.bf16.mxu0 0
      %1424 = vmatpush1.bf16.msra.mxu0 0
      %1425 = vmatprep.subr.bf16.mxu0 0
      %1426 = vmatpush1.bf16.msra.mxu0 0
      %1427 = vmatprep.subr.bf16.mxu0 0
      %1428 = vmatpush1.bf16.msra.mxu0 0
      %1429 = vmatprep.mubr.bf16.mxu0 0
      %1430 = vmatmul.mubr.bf16.gmra.mrb[0].mxu0 %v1395
      %v1431 = vpop.f32.mrb[0].mxu0
      %v1432 = vadd.f32 %v1380, %v1431
      %v1433 = vpop.f32.mrb[0].mxu0
      %v1434 = vpop.f32.mrb[0].mxu0
      %v1435 = vpop.f32.mrb[0].mxu0
      %1436 = vdwg.mxu0
      %v1437 = vadd.f32 %v701, %v1432
      %v1438 = vld [vmem:[%s669] sm:$0x1]
      %v1439 = vld [vmem:[%s672] sm:$0x1]
      %v1440 = vsel %vm704, %v1437, 0.0
      %1441 = vadd.xlane.f32.xlu0 %v1440
      %v1442 = vpop.xlane.xlu0 %1441
      %v1443 = vmul.f32 %v1442, %v708
      %v1444 = vsub.f32 %v1437, %v1443
      %v1445 = vmul.f32 %v1444, %v1444
      %v1446 = vsel %vm704, %v1445, 0.0
      %1447 = vadd.xlane.f32.xlu0 %v1446
      %v1448 = vpop.xlane.xlu0 %1447
      %v1449 = vmul.f32 %v1448, %v708
      %v1450 = vadd.f32 %v1449, 1e-05
      %v1451 = vrsqrt.pop %v1450
      %v1452 = vmul.f32 %v1444, %v1451
      %v1454 = vlaneseq
      %v1455 = vshrl.u32 %v1454, 7
      %v1456 = vsub.s32 0, %v1455
      %v1457 = vrot.slane %v1438, %v1456
      %v1459 = vmul.f32 %v1457, %v1452
      %v1461 = vlaneseq
      %v1462 = vshrl.u32 %v1461, 7
      %v1463 = vsub.s32 0, %v1462
      %v1464 = vrot.slane %v1439, %v1463
      %v1466 = vadd.f32 %v1459, %v1464
      %v1467 = vpack.c.bf16 %v1466, %v1466
      %v1468 = vld [vmem:[%s677] sm:$0xf]
      %v1469 = vld [vmem:[%s677 + $0x4] sm:$0xf]
      %v1470 = vld [vmem:[%s677 + $0x8] sm:$0xf]
      %v1471 = vld [vmem:[%s677 + $0xc] sm:$0xf]
      %v1472 = vld [vmem:[%s680] sm:$0x1]
      %v1474 = vlaneseq
      %v1475 = vshrl.u32 %v1474, 7
      %v1476 = vsub.s32 0, %v1475
      %v1477 = vrot.slane %v1472, %v1476
      %v1483 = vunpack.c.l.b16 %v1468
      %v1484 = vunpack.c.l.b16 %v1469
      %v1485 = vunpack.c.l.b16 %v1470
      %v1486 = vunpack.c.l.b16 %v1471
      %v1487 = vpack.c.b16 %v1484, %v1483
      %v1488 = vpack.c.b16 %v1486, %v1485
      %v1492 = vsel %vm704, %v1467, 0
      %1494 = vmatprep.subr.bf16.mxu0 0
      %1495 = vmatpush1.bf16.msra.mxu0 %v1487
      %1496 = vmatprep.subr.bf16.mxu0 0
      %1497 = vmatpush1.bf16.msra.mxu0 %v1488
      %1498 = vmatprep.subr.bf16.mxu0 0
      %1499 = vmatpush1.bf16.msra.mxu0 0
      %1500 = vmatprep.subr.bf16.mxu0 0
      %1501 = vmatpush1.bf16.msra.mxu0 0
      %1502 = vmatprep.subr.bf16.mxu0 0
      %1503 = vmatpush1.bf16.msra.mxu0 0
      %1504 = vmatprep.subr.bf16.mxu0 0
      %1505 = vmatpush1.bf16.msra.mxu0 0
      %1506 = vmatprep.subr.bf16.mxu0 0
      %1507 = vmatpush1.bf16.msra.mxu0 0
      %1508 = vmatprep.subr.bf16.mxu0 0
      %1509 = vmatpush1.bf16.msra.mxu0 0
      %1510 = vmatprep.subr.bf16.mxu0 0
      %1511 = vmatpush1.bf16.msra.mxu0 0
      %1512 = vmatprep.subr.bf16.mxu0 0
      %1513 = vmatpush1.bf16.msra.mxu0 0
      %1514 = vmatprep.subr.bf16.mxu0 0
      %1515 = vmatpush1.bf16.msra.mxu0 0
      %1516 = vmatprep.subr.bf16.mxu0 0
      %1517 = vmatpush1.bf16.msra.mxu0 0
      %1518 = vmatprep.subr.bf16.mxu0 0
      %1519 = vmatpush1.bf16.msra.mxu0 0
      %1520 = vmatprep.subr.bf16.mxu0 0
      %1521 = vmatpush1.bf16.msra.mxu0 0
      %1522 = vmatprep.subr.bf16.mxu0 0
      %1523 = vmatpush1.bf16.msra.mxu0 0
      %1524 = vmatprep.subr.bf16.mxu0 0
      %1525 = vmatpush1.bf16.msra.mxu0 0
      %1526 = vmatprep.mubr.bf16.mxu0 0
      %1527 = vmatmul.mubr.bf16.gmra.mrb[0].mxu0 %v1492
      %v1528 = vpop.f32.mrb[0].mxu0
      %v1529 = vadd.f32 %v1477, %v1528
      %v1530 = vpop.f32.mrb[0].mxu0
      %v1531 = vpop.f32.mrb[0].mxu0
      %v1532 = vpop.f32.mrb[0].mxu0
      %1533 = vdwg.mxu0
      %v1534 = vmul.f32 %v1529, 0.5
      %v1535 = vmul.f32 %v1529, %v1529
      %v1536 = vmul.f32 %v1529, %v1535
      %v1537 = vmul.f32 %v1536, 0.044715
      %v1538 = vadd.f32 %v1529, %v1537
      %v1539 = vmul.f32 %v1538, 0.7978846
      %v1540 = vtanh.pop %v1539
      %v1541 = vadd.f32 %v1540, 1.0
      %v1542 = vmul.f32 %v1534, %v1541
      %v1543 = vpack.c.bf16 %v1542, %v1542
      %v1544 = vld [vmem:[%s685] sm:$0xf]
      %v1545 = vld [vmem:[%s685 + $0x4] sm:$0xf]
      %v1546 = vld [vmem:[%s685 + $0x8] sm:$0xf]
      %v1547 = vld [vmem:[%s685 + $0xc] sm:$0xf]
      %v1548 = vld [vmem:[%s685 + $0x10] sm:$0xf]
      %v1549 = vld [vmem:[%s685 + $0x14] sm:$0xf]
      %v1550 = vld [vmem:[%s685 + $0x18] sm:$0xf]
      %v1551 = vld [vmem:[%s685 + $0x1c] sm:$0xf]
      %v1552 = vld [vmem:[%s685 + $0x20] sm:$0xf]
      %v1553 = vld [vmem:[%s685 + $0x24] sm:$0xf]
      %v1554 = vld [vmem:[%s685 + $0x28] sm:$0xf]
      %v1555 = vld [vmem:[%s685 + $0x2c] sm:$0xf]
      %v1556 = vld [vmem:[%s685 + $0x30] sm:$0xf]
      %v1557 = vld [vmem:[%s685 + $0x34] sm:$0xf]
      %v1558 = vld [vmem:[%s685 + $0x38] sm:$0xf]
      %v1559 = vld [vmem:[%s685 + $0x3c] sm:$0xf]
      %v1560 = vld [vmem:[%s688] sm:$0x1]
      %v1562 = vlaneseq
      %v1563 = vshrl.u32 %v1562, 7
      %v1564 = vsub.s32 0, %v1563
      %v1565 = vrot.slane %v1560, %v1564
      %v1583 = vunpack.c.l.b16 %v1544
      %v1584 = vunpack.c.l.b16 %v1545
      %v1585 = vunpack.c.l.b16 %v1546
      %v1586 = vunpack.c.l.b16 %v1547
      %v1587 = vunpack.c.l.b16 %v1548
      %v1588 = vunpack.c.l.b16 %v1549
      %v1589 = vunpack.c.l.b16 %v1550
      %v1590 = vunpack.c.l.b16 %v1551
      %v1591 = vunpack.c.l.b16 %v1552
      %v1592 = vunpack.c.l.b16 %v1553
      %v1593 = vunpack.c.l.b16 %v1554
      %v1594 = vunpack.c.l.b16 %v1555
      %v1595 = vunpack.c.l.b16 %v1556
      %v1596 = vunpack.c.l.b16 %v1557
      %v1597 = vunpack.c.l.b16 %v1558
      %v1598 = vunpack.c.l.b16 %v1559
      %v1599 = vpack.c.b16 %v1584, %v1583
      %v1600 = vpack.c.b16 %v1586, %v1585
      %v1601 = vpack.c.b16 %v1588, %v1587
      %v1602 = vpack.c.b16 %v1590, %v1589
      %v1603 = vpack.c.b16 %v1592, %v1591
      %v1604 = vpack.c.b16 %v1594, %v1593
      %v1605 = vpack.c.b16 %v1596, %v1595
      %v1606 = vpack.c.b16 %v1598, %v1597
      %1615 = vmatprep.subr.bf16.mxu0 0
      %1616 = vmatpush1.bf16.msra.mxu0 %v1599
      %1617 = vmatprep.subr.bf16.mxu0 0
      %1618 = vmatpush1.bf16.msra.mxu0 %v1600
      %1619 = vmatprep.subr.bf16.mxu0 0
      %1620 = vmatpush1.bf16.msra.mxu0 %v1601
      %1621 = vmatprep.subr.bf16.mxu0 0
      %1622 = vmatpush1.bf16.msra.mxu0 %v1602
      %1623 = vmatprep.subr.bf16.mxu0 0
      %1624 = vmatpush1.bf16.msra.mxu0 %v1603
      %1625 = vmatprep.subr.bf16.mxu0 0
      %1626 = vmatpush1.bf16.msra.mxu0 %v1604
      %1627 = vmatprep.subr.bf16.mxu0 0
      %1628 = vmatpush1.bf16.msra.mxu0 %v1605
      %1629 = vmatprep.subr.bf16.mxu0 0
      %1630 = vmatpush1.bf16.msra.mxu0 %v1606
      %1631 = vmatprep.subr.bf16.mxu0 0
      %1632 = vmatpush1.bf16.msra.mxu0 0
      %1633 = vmatprep.subr.bf16.mxu0 0
      %1634 = vmatpush1.bf16.msra.mxu0 0
      %1635 = vmatprep.subr.bf16.mxu0 0
      %1636 = vmatpush1.bf16.msra.mxu0 0
      %1637 = vmatprep.subr.bf16.mxu0 0
      %1638 = vmatpush1.bf16.msra.mxu0 0
      %1639 = vmatprep.subr.bf16.mxu0 0
      %1640 = vmatpush1.bf16.msra.mxu0 0
      %1641 = vmatprep.subr.bf16.mxu0 0
      %1642 = vmatpush1.bf16.msra.mxu0 0
      %1643 = vmatprep.subr.bf16.mxu0 0
      %1644 = vmatpush1.bf16.msra.mxu0 0
      %1645 = vmatprep.subr.bf16.mxu0 0
      %1646 = vmatpush1.bf16.msra.mxu0 0
      %1647 = vmatprep.mubr.bf16.mxu0 0
      %1648 = vmatmul.mubr.bf16.gmra.mrb[0].mxu0 %v1543
      %v1649 = vpop.f32.mrb[0].mxu0
      %v1650 = vadd.f32 %v1565, %v1649
      %v1651 = vpop.f32.mrb[0].mxu0
      %v1652 = vpop.f32.mrb[0].mxu0
      %v1653 = vpop.f32.mrb[0].mxu0
      %1654 = vdwg.mxu0
      %v1655 = vadd.f32 %v1437, %v1650
      %1656 = vst.msk [vmem:[%s692] sm:$0xff] %vm704, %v1655
      %p1657 = scmp.lt.s32.totalorder %s29, 1
      %s1658 = scalar_select %p1657, %s29, 1
      %s1659 = smul.addr %s1658, 8
      %s1660 = scalar_lea.vmem %s14, %s1659
      // Predicated region
      $region81: #{gpt_forward.2} parent=75 // pred_check
        %p1661 = pneg %p419
      $region82: #{gpt_forward.2} parent=75 // pred_check_branch
        %1663 = sbr.rel (%p1661) target = $region84
      $region83: #{gpt_forward.2} parent=75 // pred_region
        _
      $region84: #{gpt_forward.2} parent=75 // pred_fallthru
        _
    $region76: #{gpt_forward.2} parent=5 // pred_fallthru
      _
    %p1664 = scmp.le.s32.totalorder 2, %s20
    // Predicated region
    $region85: #{gpt_forward.2} parent=5 // pred_check
      %p1665 = pneg %p1664
    $region86: #{gpt_forward.2} parent=5 // pred_check_branch
      %1667 = sbr.rel (%p1665) target = $region88
    $region87: #{gpt_forward.2} parent=5 // pred_region
      %s1668 = ssub.s32 %s20, 2
      // Predicated region
      $region89: #{gpt_forward.2} parent=87 // pred_check
        %p1669 = pneg %p425
      $region90: #{gpt_forward.2} parent=87 // pred_check_branch
        %1671 = sbr.rel (%p1669) target = $region92
      $region91: #{gpt_forward.2} parent=87 // pred_region
        %p1672 = scmp.lt.s32.totalorder %s31, 1
        %s1673 = scalar_select %p1672, %s31, 1
        %s1674 = smul.addr %s1673, 8
        %s1675 = scalar_lea.vmem %s14, %s1674
      $region92: #{gpt_forward.2} parent=87 // pred_fallthru
        _
    $region88: #{gpt_forward.2} parent=5 // pred_fallthru
      _
  $region6: #{gpt_forward.2} parent=0 // loop_footer
    %s24 = sadd.s32 1, %s20
  $region7: #{gpt_forward.2} parent=0 // loop_footer_branch
    %19 = sbr.rel target = $region3
  $region8: #{gpt_forward.2} parent=0 // loop_exit
    _

</llo_original>
